<compile_context>
chip_gen: v7x
topology: tpu7x:2x2x1
jax: 0.10.0
libtpu: 0.0.40
codegen_flags: <defaults>
</compile_context>

<pallas_src>
import jax
import jax.numpy as jnp
from jax import lax
from jax.experimental import pallas as pl
from jax.experimental.pallas import tpu as pltpu


# ---------------------------------------------------------------------------
# Kernels
# ---------------------------------------------------------------------------

def conv_bn_relu_pool_kernel(p_ref, w_ref, s_ref, b_ref, o_ref):
    """Fused conv-as-matmul + folded BN + ReLU + 2x2 max-pool.

    p_ref: (4, Mb, K)  im2col patches; leading axis = the 4 corners of each
                       2x2 pooling window (pre-ordered by the wrapper).
    w_ref: (K, Cout)   conv weights reshaped to one matmul operand.
    s_ref, b_ref: (1, Cout) folded BatchNorm scale / bias.
    o_ref: (Mb, Cout)  pooled output rows, (n, h_out, w_out) row-major.
    """
    w = w_ref[...]
    s = s_ref[...]
    b = b_ref[...]

    def corner(q):
        y = jnp.dot(p_ref[q], w, preferred_element_type=jnp.float32)
        return jnp.maximum(y * s + b, 0.0)

    pooled = jnp.maximum(jnp.maximum(corner(0), corner(1)),
                         jnp.maximum(corner(2), corner(3)))
    o_ref[...] = pooled.astype(o_ref.dtype)


def mlp_head_kernel(x_ref, w1_ref, b1_ref, w2_ref, b2_ref, o_ref):
    """Fused fc1 + ReLU + (dropout == identity at inference) + fc2."""
    h = jnp.dot(x_ref[...], w1_ref[...], preferred_element_type=jnp.float32)
    h = jnp.maximum(h + b1_ref[...], 0.0)
    out = jnp.dot(h, w2_ref[...], preferred_element_type=jnp.float32) + b2_ref[...]
    o_ref[...] = out.astype(o_ref.dtype)


# ---------------------------------------------------------------------------
# Wrappers
# ---------------------------------------------------------------------------

def _fold_bn(bn, eps=1e-5):
    scale = bn["gamma"] / jnp.sqrt(bn["var"] + eps)
    bias = bn["beta"] - bn["mean"] * scale
    return scale.astype(jnp.float32), bias.astype(jnp.float32)


def _conv_stage(x_nhwc, w_hwio, scale, bias, *, band_splits=2):
    """conv3x3(pad=1, no bias) + BN + ReLU + maxpool2x2 via one fused kernel."""
    N, H, W, Cin = x_nhwc.shape
    Cout = w_hwio.shape[-1]
    Ho, Wo = H // 2, W // 2
    K = 9 * Cin
    Mq = N * Ho * Wo                       # number of pooled output rows
    assert Mq % (8 * band_splits) == 0

    # ---- wrapper-side layout plumbing: im2col + pooling-window reordering ----
    xp = jnp.pad(x_nhwc, ((0, 0), (1, 1), (1, 1), (0, 0)))
    cols = [xp[:, kh:kh + H, kw:kw + W, :] for kh in range(3) for kw in range(3)]
    patches = jnp.concatenate(cols, axis=-1)                  # (N, H, W, 9*Cin)
    # Put the 4 members of each 2x2 pool window into 4 contiguous row blocks
    # of size Mq so the kernel pools with aligned elementwise maxes.
    p = patches.reshape(N, Ho, 2, Wo, 2, K)
    p = jnp.transpose(p, (2, 4, 0, 1, 3, 5))                  # (2,2,N,Ho,Wo,K)
    p = p.reshape(4, Mq, K)

    w_mat = w_hwio.reshape(K, Cout).astype(jnp.float32)       # (kh,kw,cin) major
    s = scale.reshape(1, Cout)
    b = bias.reshape(1, Cout)

    Mb = Mq // band_splits
    out = pl.pallas_call(
        conv_bn_relu_pool_kernel,
        out_shape=jax.ShapeDtypeStruct((Mq, Cout), jnp.float32),
        grid=(band_splits,),
        in_specs=[
            pl.BlockSpec((4, Mb, K), lambda i: (0, i, 0)),
            pl.BlockSpec((K, Cout), lambda i: (0, 0)),
            pl.BlockSpec((1, Cout), lambda i: (0, 0)),
            pl.BlockSpec((1, Cout), lambda i: (0, 0)),
        ],
        out_specs=pl.BlockSpec((Mb, Cout), lambda i: (i, 0)),
        compiler_params=pltpu.CompilerParams(
            dimension_semantics=("parallel",)),
    )(p, w_mat, s, b)

    return out.reshape(N, Ho, Wo, Cout)


def _adaptive_avg_pool_4x4(x_nhwc):
    """AdaptiveAvgPool2d((4,4)); identity at the 4x4 feature map this net produces."""
    N, H, W, C = x_nhwc.shape
    assert H % 4 == 0 and W % 4 == 0  # TODO(synk): fractional adaptive pooling (upsampling case)
    return x_nhwc.reshape(N, 4, H // 4, 4, W // 4, C).mean(axis=(2, 4))


def _mlp_head(feat, w1, b1, w2, b2):
    N = feat.shape[0]
    num_classes = w2.shape[-1]
    return pl.pallas_call(
        mlp_head_kernel,
        out_shape=jax.ShapeDtypeStruct((N, num_classes), jnp.float32),
    )(feat, w1, b1.reshape(1, -1), w2, b2.reshape(1, -1))


def basic_cnn_forward(x_nchw, params):
    """Pallas forward pass of BasicCNN (inference). x_nchw: (N, C, H, W) f32."""
    x = jnp.transpose(x_nchw, (0, 2, 3, 1)).astype(jnp.float32)   # NCHW -> NHWC
    x = _conv_stage(x, params["w1"], *_fold_bn(params["bn1"]))
    x = _conv_stage(x, params["w2"], *_fold_bn(params["bn2"]))
    x = _conv_stage(x, params["w3"], *_fold_bn(params["bn3"]))
    x = _adaptive_avg_pool_4x4(x)
    # NHWC flatten; fc1 weights below are defined for this ordering (equivalent
    # to PyTorch's NCHW flatten up to a permutation of the learned weight rows).
    feat = x.reshape(x.shape[0], -1)
    return _mlp_head(feat, params["fc1_w"], params["fc1_b"],
                     params["fc2_w"], params["fc2_b"])


# ---------------------------------------------------------------------------
# Pure-JAX reference (same math) for validation
# ---------------------------------------------------------------------------

def basic_cnn_reference(x_nchw, params, eps=1e-5):
    def conv(x, w):
        return lax.conv_general_dilated(
            x, w, window_strides=(1, 1), padding="SAME",
            dimension_numbers=("NHWC", "HWIO", "NHWC"))

    def bn(x, p):
        scale = p["gamma"] / jnp.sqrt(p["var"] + eps)
        return x * scale + (p["beta"] - p["mean"] * scale)

    def pool(x):
        return lax.reduce_window(x, -jnp.inf, lax.max,
                                 (1, 2, 2, 1), (1, 2, 2, 1), "VALID")

    x = jnp.transpose(x_nchw, (0, 2, 3, 1)).astype(jnp.float32)
    x = pool(jax.nn.relu(bn(conv(x, params["w1"]), params["bn1"])))
    x = pool(jax.nn.relu(bn(conv(x, params["w2"]), params["bn2"])))
    x = pool(jax.nn.relu(bn(conv(x, params["w3"]), params["bn3"])))
    x = _adaptive_avg_pool_4x4(x)
    feat = x.reshape(x.shape[0], -1)
    h = jax.nn.relu(feat @ params["fc1_w"] + params["fc1_b"])
    return h @ params["fc2_w"] + params["fc2_b"]


if __name__ == "__main__":
    # Shapes implied by the module: fc1 expects 128*4*4 features, so a
    # CIFAR-like 32x32, 3-channel input (three 2x2 pools -> 4x4 feature map).
    N, Cin, H, W = 2, 3, 32, 32
    num_classes = 10

    key = jax.random.PRNGKey(0)
    ks = jax.random.split(key, 11)

    def bn_params(k, c):
        k1, k2, k3, k4 = jax.random.split(k, 4)
        return dict(gamma=1.0 + 0.1 * jax.random.normal(k1, (c,), jnp.float32),
                    beta=0.1 * jax.random.normal(k2, (c,), jnp.float32),
                    mean=0.1 * jax.random.normal(k3, (c,), jnp.float32),
                    var=jnp.abs(jax.random.normal(k4, (c,), jnp.float32)) + 0.5)

    def conv_w(k, cin, cout):  # HWIO layout
        return jax.random.normal(k, (3, 3, cin, cout), jnp.float32) * (2.0 / (9 * cin)) ** 0.5

    params = dict(
        w1=conv_w(ks[0], Cin, 32),  bn1=bn_params(ks[1], 32),
        w2=conv_w(ks[2], 32, 64),   bn2=bn_params(ks[3], 64),
        w3=conv_w(ks[4], 64, 128),  bn3=bn_params(ks[5], 128),
        fc1_w=jax.random.normal(ks[6], (128 * 4 * 4, 512), jnp.float32) * (2.0 / 2048) ** 0.5,
        fc1_b=0.1 * jax.random.normal(ks[7], (512,), jnp.float32),
        fc2_w=jax.random.normal(ks[8], (512, num_classes), jnp.float32) * (2.0 / 512) ** 0.5,
        fc2_b=0.1 * jax.random.normal(ks[9], (num_classes,), jnp.float32),
    )

    x = jax.random.normal(ks[10], (N, Cin, H, W), jnp.float32)

    out = jax.block_until_ready(basic_cnn_forward(x, params))
    ref = jax.block_until_ready(basic_cnn_reference(x, params))

    assert out.shape == (N, num_classes)
    max_err = float(jnp.max(jnp.abs(out - ref)))
    assert jnp.allclose(out, ref, rtol=1e-3, atol=1e-3), f"max err {max_err}"

    print("KERNEL_OK")
</pallas_src>

<mosaic_0001>
module attributes {stable_mosaic.version = 11 : i64} {
  func.func @conv_bn_relu_pool_kernel(%arg0: i32, %arg1: memref<4x256x27xf32, #tpu.memory_space<vmem>>, %arg2: memref<27x32xf32, #tpu.memory_space<vmem>>, %arg3: memref<1x32xf32, #tpu.memory_space<vmem>>, %arg4: memref<1x32xf32, #tpu.memory_space<vmem>>, %arg5: memref<256x32xf32, #tpu.memory_space<vmem>>) attributes {dimension_semantics = [#tpu.dimension_semantics<parallel>], iteration_bounds = array<i64: 2>, scalar_prefetch = 0 : i64, scratch_operands = 0 : i64, tpu.core_type = #tpu.core_type<tc>, window_params = [{transform_indices = @transform_0, window_bounds = array<i64: 4, 256, 27>}, {pipeline_mode = #tpu.pipeline_mode<synchronous>, transform_indices = @transform_1, window_bounds = array<i64: 27, 32>}, {pipeline_mode = #tpu.pipeline_mode<synchronous>, transform_indices = @transform_2, window_bounds = array<i64: 1, 32>}, {pipeline_mode = #tpu.pipeline_mode<synchronous>, transform_indices = @transform_3, window_bounds = array<i64: 1, 32>}, {transform_indices = @transform_4, window_bounds = array<i64: 256, 32>}]} {
    %c0 = arith.constant 0 : index
    %c0_0 = arith.constant 0 : index
    %0 = vector.load %arg2[%c0, %c0_0] : memref<27x32xf32, #tpu.memory_space<vmem>>, vector<27x32xf32>
    %c0_1 = arith.constant 0 : index
    %c0_2 = arith.constant 0 : index
    %1 = vector.load %arg3[%c0_1, %c0_2] : memref<1x32xf32, #tpu.memory_space<vmem>>, vector<1x32xf32>
    %c0_3 = arith.constant 0 : index
    %c0_4 = arith.constant 0 : index
    %2 = vector.load %arg4[%c0_3, %c0_4] : memref<1x32xf32, #tpu.memory_space<vmem>>, vector<1x32xf32>
    %c0_5 = arith.constant 0 : index
    %c0_6 = arith.constant 0 : index
    %c0_7 = arith.constant 0 : index
    %3 = vector.load %arg1[%c0_5, %c0_6, %c0_7] : memref<4x256x27xf32, #tpu.memory_space<vmem>>, vector<1x256x27xf32>
    %4 = vector.shape_cast %3 : vector<1x256x27xf32> to vector<256x27xf32>
    %cst = arith.constant dense<0.000000e+00> : vector<256x32xf32>
    %5 = tpu.matmul %4, %0, %cst {dimension_numbers = #tpu.dot_dimension_numbers<[1], [0], [0], [1], [0, 0, 1, 1], [], []>} : vector<256x27xf32>, vector<27x32xf32>, vector<256x32xf32> -> vector<256x32xf32>
    %6 = vector.broadcast %1 : vector<1x32xf32> to vector<256x32xf32>
    %7 = arith.mulf %5, %6 : vector<256x32xf32>
    %8 = vector.broadcast %2 : vector<1x32xf32> to vector<256x32xf32>
    %9 = arith.addf %7, %8 : vector<256x32xf32>
    %cst_8 = arith.constant 0.000000e+00 : f32
    %10 = vector.broadcast %cst_8 : f32 to vector<256x32xf32>
    %11 = arith.maximumf %9, %10 : vector<256x32xf32>
    %c1 = arith.constant 1 : index
    %c0_9 = arith.constant 0 : index
    %c0_10 = arith.constant 0 : index
    %12 = vector.load %arg1[%c1, %c0_9, %c0_10] : memref<4x256x27xf32, #tpu.memory_space<vmem>>, vector<1x256x27xf32>
    %13 = vector.shape_cast %12 : vector<1x256x27xf32> to vector<256x27xf32>
    %cst_11 = arith.constant dense<0.000000e+00> : vector<256x32xf32>
    %14 = tpu.matmul %13, %0, %cst_11 {dimension_numbers = #tpu.dot_dimension_numbers<[1], [0], [0], [1], [0, 0, 1, 1], [], []>} : vector<256x27xf32>, vector<27x32xf32>, vector<256x32xf32> -> vector<256x32xf32>
    %15 = vector.broadcast %1 : vector<1x32xf32> to vector<256x32xf32>
    %16 = arith.mulf %14, %15 : vector<256x32xf32>
    %17 = vector.broadcast %2 : vector<1x32xf32> to vector<256x32xf32>
    %18 = arith.addf %16, %17 : vector<256x32xf32>
    %cst_12 = arith.constant 0.000000e+00 : f32
    %19 = vector.broadcast %cst_12 : f32 to vector<256x32xf32>
    %20 = arith.maximumf %18, %19 : vector<256x32xf32>
    %21 = arith.maximumf %11, %20 : vector<256x32xf32>
    %c2 = arith.constant 2 : index
    %c0_13 = arith.constant 0 : index
    %c0_14 = arith.constant 0 : index
    %22 = vector.load %arg1[%c2, %c0_13, %c0_14] : memref<4x256x27xf32, #tpu.memory_space<vmem>>, vector<1x256x27xf32>
    %23 = vector.shape_cast %22 : vector<1x256x27xf32> to vector<256x27xf32>
    %cst_15 = arith.constant dense<0.000000e+00> : vector<256x32xf32>
    %24 = tpu.matmul %23, %0, %cst_15 {dimension_numbers = #tpu.dot_dimension_numbers<[1], [0], [0], [1], [0, 0, 1, 1], [], []>} : vector<256x27xf32>, vector<27x32xf32>, vector<256x32xf32> -> vector<256x32xf32>
    %25 = vector.broadcast %1 : vector<1x32xf32> to vector<256x32xf32>
    %26 = arith.mulf %24, %25 : vector<256x32xf32>
    %27 = vector.broadcast %2 : vector<1x32xf32> to vector<256x32xf32>
    %28 = arith.addf %26, %27 : vector<256x32xf32>
    %cst_16 = arith.constant 0.000000e+00 : f32
    %29 = vector.broadcast %cst_16 : f32 to vector<256x32xf32>
    %30 = arith.maximumf %28, %29 : vector<256x32xf32>
    %c3 = arith.constant 3 : index
    %c0_17 = arith.constant 0 : index
    %c0_18 = arith.constant 0 : index
    %31 = vector.load %arg1[%c3, %c0_17, %c0_18] : memref<4x256x27xf32, #tpu.memory_space<vmem>>, vector<1x256x27xf32>
    %32 = vector.shape_cast %31 : vector<1x256x27xf32> to vector<256x27xf32>
    %cst_19 = arith.constant dense<0.000000e+00> : vector<256x32xf32>
    %33 = tpu.matmul %32, %0, %cst_19 {dimension_numbers = #tpu.dot_dimension_numbers<[1], [0], [0], [1], [0, 0, 1, 1], [], []>} : vector<256x27xf32>, vector<27x32xf32>, vector<256x32xf32> -> vector<256x32xf32>
    %34 = vector.broadcast %1 : vector<1x32xf32> to vector<256x32xf32>
    %35 = arith.mulf %33, %34 : vector<256x32xf32>
    %36 = vector.broadcast %2 : vector<1x32xf32> to vector<256x32xf32>
    %37 = arith.addf %35, %36 : vector<256x32xf32>
    %cst_20 = arith.constant 0.000000e+00 : f32
    %38 = vector.broadcast %cst_20 : f32 to vector<256x32xf32>
    %39 = arith.maximumf %37, %38 : vector<256x32xf32>
    %40 = arith.maximumf %30, %39 : vector<256x32xf32>
    %41 = arith.maximumf %21, %40 : vector<256x32xf32>
    %c0_21 = arith.constant 0 : index
    %c0_22 = arith.constant 0 : index
    %42 = vector.load %arg5[%c0_21, %c0_22] : memref<256x32xf32, #tpu.memory_space<vmem>>, vector<256x32xf32>
    tpu.vector_store %arg5[%c0_21, %c0_22], %41 {strides = array<i32>} : memref<256x32xf32, #tpu.memory_space<vmem>>, vector<256x32xf32>,
    return
  }
  func.func @transform_0(%arg0: i32) -> (i32, i32, i32) {
    %c0_i32 = arith.constant 0 : i32
    %c0_i32_0 = arith.constant 0 : i32
    %c0_i32_1 = arith.constant 0 : i32
    return %c0_i32, %arg0, %c0_i32_0 : i32, i32, i32
  }
  func.func @transform_1(%arg0: i32) -> (i32, i32) {
    %c0_i32 = arith.constant 0 : i32
    %c0_i32_0 = arith.constant 0 : i32
    %c0_i32_1 = arith.constant 0 : i32
    return %c0_i32, %c0_i32_0 : i32, i32
  }
  func.func @transform_2(%arg0: i32) -> (i32, i32) {
    %c0_i32 = arith.constant 0 : i32
    %c0_i32_0 = arith.constant 0 : i32
    %c0_i32_1 = arith.constant 0 : i32
    return %c0_i32, %c0_i32_0 : i32, i32
  }
  func.func @transform_3(%arg0: i32) -> (i32, i32) {
    %c0_i32 = arith.constant 0 : i32
    %c0_i32_0 = arith.constant 0 : i32
    %c0_i32_1 = arith.constant 0 : i32
    return %c0_i32, %c0_i32_0 : i32, i32
  }
  func.func @transform_4(%arg0: i32) -> (i32, i32) {
    %c0_i32 = arith.constant 0 : i32
    %c0_i32_0 = arith.constant 0 : i32
    return %arg0, %c0_i32 : i32, i32
  }
}

</mosaic_0001>

<llo_original>
// kernel: tpu_custom_call.1
$region0: #{tpu_custom_call.1}
  #allocation0 [shape = 'u32[]', space=smem, size = 0x4, offset = 0x4, fixed_abs, tag = 'smem constant byte address 0x4 - core index']
  #allocation1 [shape = 'u32[144,128]{1,0:T(1,128)}', space=vmem, size = 0x12000, scoped, tag = 'internal scratch']
  %s0 = inlined_call_operand.vmem [shape: f32[4,512,27], index: 0, kind: input, shape index: {}]
  %s1 = inlined_call_operand.vmem [shape: f32[27,32], index: 1, kind: input, shape index: {}]
  %s2 = inlined_call_operand.vmem [shape: f32[1,32], index: 2, kind: input, shape index: {}]
  %s3 = inlined_call_operand.vmem [shape: f32[1,32], index: 3, kind: input, shape index: {}]
  %s4 = inlined_call_operand.vmem [shape: f32[512,32], index: 4, kind: output, shape index: {}]
  %s5 = sld [smem:[#allocation0]]
  $region87: #{tpu_custom_call.1} parent=0
    _
  %s7 = ssub.s32 1, %s5
  %s8 = scalar_select 0, %s7, %s5
  $region1: #{tpu_custom_call.1} parent=0
    #allocation2 [shape = 'u8[1048576]{0}', space=vmem, size = 0x100000, scoped, tag = 'input window, operand 0']
    loop: start=0, step=1, limit=4
    $region2: #{tpu_custom_call.1} parent=1 // loop_pre_header
      _
    $region3: #{tpu_custom_call.1} parent=1 // loop_header
      %s10 = sphi 0, %s14
      %p11 = scmp.ge.s32.totalorder %s10, 4
      %s20 = sphi 0, %s22
      %s23 = sphi 0, %s20
      %s24 = sphi 0, %s23
      %s40 = sphi 0, %s24
      %s44 = sphi 0, %s44
      %s46 = sphi 0, %s44
      %s47 = sphi 0, %s46
      %s61 = sphi 0, %s47
      %s65 = sphi 0, %s65
      %s67 = sphi 0, %s65
      %s68 = sphi 0, %s67
      %s82 = sphi 0, %s68
      %s86 = sphi 0, %s86
      %s88 = sphi 0, %s86
      %s89 = sphi 0, %s88
      %s103 = sphi 0, %s89
      %s109 = sphi 0, %s111
      %s112 = sphi 0, %s109
      %s113 = sphi 0, %s112
      %s129 = sphi 0, %s113
    $region4: #{tpu_custom_call.1} parent=1 // loop_header_branch
      %13 = sbr.rel (%p11) target = $region8
    $region5: #{tpu_custom_call.1} parent=1 // loop_body
      %s15 = ssub.s32 %s10, 1
      %s16 = ssub.s32 %s10, 2
      %s17 = sadd.s32 %s10, 1
      %s18 = ssub.s32 %s10, %s17
      %p19 = scmp.eq.s32.totalorder %s18, 0
      %s21 = sadd.s32 %s20, 1
      %s22 = scalar_select %p19, %s20, %s21
      %p25 = pneg %p19
      %p26 = scmp.eq.s32.totalorder %s10, 1
      %p27 = por %p25, %p26
      %p28 = scmp.ne.s32.totalorder %s20, %s23
      %p29 = scmp.eq.s32.totalorder %s10, 0
      %p30 = por %p28, %p29
      %p31 = scmp.ne.s32.totalorder %s20, %s23
      %p32 = scmp.eq.s32.totalorder %s15, 1
      %p33 = por %p31, %p32
      %p34 = scmp.ne.s32.totalorder %s23, %s24
      %p35 = scmp.eq.s32.totalorder %s15, 0
      %p36 = por %p34, %p35
      %p37 = scmp.ne.s32.totalorder %s23, %s24
      %p38 = scmp.eq.s32.totalorder %s16, 1
      %p39 = por %p37, %p38
      %p41 = scmp.ne.s32.totalorder %s24, %s40
      %p42 = scmp.eq.s32.totalorder %s16, 0
      %p43 = por %p41, %p42
      %s45 = sadd.s32 %s44, 1
      %p48 = scmp.eq.s32.totalorder %s10, 1
      %p49 = scmp.ne.s32.totalorder %s44, %s46
      %p50 = scmp.eq.s32.totalorder %s10, 0
      %p51 = por %p49, %p50
      %p52 = scmp.ne.s32.totalorder %s44, %s46
      %p53 = scmp.eq.s32.totalorder %s15, 1
      %p54 = por %p52, %p53
      %p55 = scmp.ne.s32.totalorder %s46, %s47
      %p56 = scmp.eq.s32.totalorder %s15, 0
      %p57 = por %p55, %p56
      %p58 = scmp.ne.s32.totalorder %s46, %s47
      %p59 = scmp.eq.s32.totalorder %s16, 1
      %p60 = por %p58, %p59
      %p62 = scmp.ne.s32.totalorder %s47, %s61
      %p63 = scmp.eq.s32.totalorder %s16, 0
      %p64 = por %p62, %p63
      %s66 = sadd.s32 %s65, 1
      %p69 = scmp.eq.s32.totalorder %s10, 1
      %p70 = scmp.ne.s32.totalorder %s65, %s67
      %p71 = scmp.eq.s32.totalorder %s10, 0
      %p72 = por %p70, %p71
      %p73 = scmp.ne.s32.totalorder %s65, %s67
      %p74 = scmp.eq.s32.totalorder %s15, 1
      %p75 = por %p73, %p74
      %p76 = scmp.ne.s32.totalorder %s67, %s68
      %p77 = scmp.eq.s32.totalorder %s15, 0
      %p78 = por %p76, %p77
      %p79 = scmp.ne.s32.totalorder %s67, %s68
      %p80 = scmp.eq.s32.totalorder %s16, 1
      %p81 = por %p79, %p80
      %p83 = scmp.ne.s32.totalorder %s68, %s82
      %p84 = scmp.eq.s32.totalorder %s16, 0
      %p85 = por %p83, %p84
      %s87 = sadd.s32 %s86, 1
      %p90 = scmp.eq.s32.totalorder %s10, 1
      %p91 = scmp.ne.s32.totalorder %s86, %s88
      %p92 = scmp.eq.s32.totalorder %s10, 0
      %p93 = por %p91, %p92
      %p94 = scmp.ne.s32.totalorder %s86, %s88
      %p95 = scmp.eq.s32.totalorder %s15, 1
      %p96 = por %p94, %p95
      %p97 = scmp.ne.s32.totalorder %s88, %s89
      %p98 = scmp.eq.s32.totalorder %s15, 0
      %p99 = por %p97, %p98
      %p100 = scmp.ne.s32.totalorder %s88, %s89
      %p101 = scmp.eq.s32.totalorder %s16, 1
      %p102 = por %p100, %p101
      %p104 = scmp.ne.s32.totalorder %s89, %s103
      %p105 = scmp.eq.s32.totalorder %s16, 0
      %p106 = por %p104, %p105
      %s107 = ssub.s32 %s10, %s17
      %p108 = scmp.eq.s32.totalorder %s107, 0
      %s110 = sadd.s32 %s109, 1
      %s111 = scalar_select %p108, %s109, %s110
      %p114 = pneg %p108
      %p115 = scmp.eq.s32.totalorder %s10, 1
      %p116 = por %p114, %p115
      %p117 = scmp.ne.s32.totalorder %s109, %s112
      %p118 = scmp.eq.s32.totalorder %s10, 0
      %p119 = por %p117, %p118
      %p120 = scmp.ne.s32.totalorder %s109, %s112
      %p121 = scmp.eq.s32.totalorder %s15, 1
      %p122 = por %p120, %p121
      %p123 = scmp.ne.s32.totalorder %s112, %s113
      %p124 = scmp.eq.s32.totalorder %s15, 0
      %p125 = por %p123, %p124
      %p126 = scmp.ne.s32.totalorder %s112, %s113
      %p127 = scmp.eq.s32.totalorder %s16, 1
      %p128 = por %p126, %p127
      %p130 = scmp.ne.s32.totalorder %s113, %s129
      %p131 = scmp.eq.s32.totalorder %s16, 0
      %p132 = por %p130, %p131
      %p133 = scmp.le.s32.totalorder 1, %s10
      %p134 = scmp.lt.s32.totalorder %s10, 3
      %p135 = pnand %p133, %p134
      %p136 = pneg %p135
      // Predicated region
      $region9: #{tpu_custom_call.1} parent=5 // pred_check
        _
      $region10: #{tpu_custom_call.1} parent=5 // pred_check_branch
        %138 = sbr.rel (%p135) target = $region12
      $region11: #{tpu_custom_call.1} parent=5 // pred_region
        %s139 = ssub.s32 %s10, 1
        // Predicated region
        $region13: #{tpu_custom_call.1} parent=11 // pred_check
          %p140 = pneg %p57
        $region14: #{tpu_custom_call.1} parent=11 // pred_check_branch
          %142 = sbr.rel (%p140) target = $region16
        $region15: #{tpu_custom_call.1} parent=11 // pred_region
          _
        $region16: #{tpu_custom_call.1} parent=11 // pred_fallthru
          _
        // Predicated region
        $region17: #{tpu_custom_call.1} parent=11 // pred_check
          %p143 = pneg %p78
        $region18: #{tpu_custom_call.1} parent=11 // pred_check_branch
          %145 = sbr.rel (%p143) target = $region20
        $region19: #{tpu_custom_call.1} parent=11 // pred_region
          _
        $region20: #{tpu_custom_call.1} parent=11 // pred_fallthru
          _
        // Predicated region
        $region21: #{tpu_custom_call.1} parent=11 // pred_check
          %p146 = pneg %p99
        $region22: #{tpu_custom_call.1} parent=11 // pred_check_branch
          %148 = sbr.rel (%p146) target = $region24
        $region23: #{tpu_custom_call.1} parent=11 // pred_region
          _
        $region24: #{tpu_custom_call.1} parent=11 // pred_fallthru
          _
      $region12: #{tpu_custom_call.1} parent=5 // pred_fallthru
        _
      %p149 = scmp.lt.s32.totalorder %s10, 2
      // Predicated region
      $region25: #{tpu_custom_call.1} parent=5 // pred_check
        %p150 = pneg %p149
      $region26: #{tpu_custom_call.1} parent=5 // pred_check_branch
        %152 = sbr.rel (%p150) target = $region28
      $region27: #{tpu_custom_call.1} parent=5 // pred_region
        // Predicated region
        $region29: #{tpu_custom_call.1} parent=27 // pred_check
          %p153 = pneg %p30
        $region30: #{tpu_custom_call.1} parent=27 // pred_check_branch
          %155 = sbr.rel (%p153) target = $region32
        $region31: #{tpu_custom_call.1} parent=27 // pred_region
          %s156 = sand.u32 %s20, 1
          %s157 = sand.u32 %s20, 1
          %s158 = smul.addr %s157, 1024
          %s159 = scalar_lea.vmem [#allocation2], %s158
          %s160 = smul.u32 32, %s10
          %s161 = smul.addr %s160, 8
          %s162 = scalar_lea.vmem %s0, %s161
          // Predicated region
          $region33: #{tpu_custom_call.1} parent=31 // pred_check
            _
          $region34: #{tpu_custom_call.1} parent=31 // pred_check_branch
            %164 = sbr.rel (0) target = $region36
          $region35: #{tpu_custom_call.1} parent=31 // pred_region
            // Predicated region
            $region37: #{tpu_custom_call.1} parent=35 // pred_check
              _
            $region38: #{tpu_custom_call.1} parent=35 // pred_check_branch
              %166 = sbr.rel (0) target = $region40
            $region39: #{tpu_custom_call.1} parent=35 // pred_region
              // Predicated region
              $region52: #{tpu_custom_call.1} parent=39 // pred_check
                _
              $region53: #{tpu_custom_call.1} parent=39 // pred_check_branch
                %435 = sbr.rel (0) target = $region55
              $region54: #{tpu_custom_call.1} parent=39 // pred_region
                loop: start=0, step=1, limit=1
                $region56: #{tpu_custom_call.1} parent=54 // loop_pre_header
                  _
                $region57: #{tpu_custom_call.1} parent=54 // loop_header
                  %s437 = sphi 0, %s441
                  %p438 = scmp.ge.s32.totalorder %s437, 1
                  %s442 = sphi %s162, %s162
                  %s443 = sphi %s159, %s159
                $region58: #{tpu_custom_call.1} parent=54 // loop_header_branch
                  %440 = sbr.rel (%p438) target = $region62
                $region59: #{tpu_custom_call.1} parent=54 // loop_body
                  %v444 = vld [vmem:[%s442] sm:$0xff]
                  %445 = vst [vmem:[%s443] sm:$0xff] %v444
                  %v446 = vld [vmem:[%s442 + $0x8] sm:$0xff]
                  %447 = vst [vmem:[%s443 + $0x8] sm:$0xff] %v446
                  %v448 = vld [vmem:[%s442 + $0x10] sm:$0xff]
                  %449 = vst [vmem:[%s443 + $0x10] sm:$0xff] %v448
                  %v450 = vld [vmem:[%s442 + $0x18] sm:$0xff]
                  %451 = vst [vmem:[%s443 + $0x18] sm:$0xff] %v450
                  %v452 = vld [vmem:[%s442 + $0x20] sm:$0xff]
                  %453 = vst [vmem:[%s443 + $0x20] sm:$0xff] %v452
                  %v454 = vld [vmem:[%s442 + $0x28] sm:$0xff]
                  %455 = vst [vmem:[%s443 + $0x28] sm:$0xff] %v454
                  %v456 = vld [vmem:[%s442 + $0x30] sm:$0xff]
                  %457 = vst [vmem:[%s443 + $0x30] sm:$0xff] %v456
                  %v458 = vld [vmem:[%s442 + $0x38] sm:$0xff]
                  %459 = vst [vmem:[%s443 + $0x38] sm:$0xff] %v458
                  %v460 = vld [vmem:[%s442 + $0x40] sm:$0xff]
                  %461 = vst [vmem:[%s443 + $0x40] sm:$0xff] %v460
                  %v462 = vld [vmem:[%s442 + $0x48] sm:$0xff]
                  %463 = vst [vmem:[%s443 + $0x48] sm:$0xff] %v462
                  %v464 = vld [vmem:[%s442 + $0x50] sm:$0xff]
                  %465 = vst [vmem:[%s443 + $0x50] sm:$0xff] %v464
                  %v466 = vld [vmem:[%s442 + $0x58] sm:$0xff]
                  %467 = vst [vmem:[%s443 + $0x58] sm:$0xff] %v466
                  %v468 = vld [vmem:[%s442 + $0x60] sm:$0xff]
                  %469 = vst [vmem:[%s443 + $0x60] sm:$0xff] %v468
                  %v470 = vld [vmem:[%s442 + $0x68] sm:$0xff]
                  %471 = vst [vmem:[%s443 + $0x68] sm:$0xff] %v470
                  %v472 = vld [vmem:[%s442 + $0x70] sm:$0xff]
                  %473 = vst [vmem:[%s443 + $0x70] sm:$0xff] %v472
                  %v474 = vld [vmem:[%s442 + $0x78] sm:$0xff]
                  %475 = vst [vmem:[%s443 + $0x78] sm:$0xff] %v474
                  %v476 = vld [vmem:[%s442 + $0x80] sm:$0xff]
                  %477 = vst [vmem:[%s443 + $0x80] sm:$0xff] %v476
                  %v478 = vld [vmem:[%s442 + $0x88] sm:$0xff]
                  %479 = vst [vmem:[%s443 + $0x88] sm:$0xff] %v478
                  %v480 = vld [vmem:[%s442 + $0x90] sm:$0xff]
                  %481 = vst [vmem:[%s443 + $0x90] sm:$0xff] %v480
                  %v482 = vld [vmem:[%s442 + $0x98] sm:$0xff]
                  %483 = vst [vmem:[%s443 + $0x98] sm:$0xff] %v482
                  %v484 = vld [vmem:[%s442 + $0xa0] sm:$0xff]
                  %485 = vst [vmem:[%s443 + $0xa0] sm:$0xff] %v484
                  %v486 = vld [vmem:[%s442 + $0xa8] sm:$0xff]
                  %487 = vst [vmem:[%s443 + $0xa8] sm:$0xff] %v486
                  %v488 = vld [vmem:[%s442 + $0xb0] sm:$0xff]
                  %489 = vst [vmem:[%s443 + $0xb0] sm:$0xff] %v488
                  %v490 = vld [vmem:[%s442 + $0xb8] sm:$0xff]
                  %491 = vst [vmem:[%s443 + $0xb8] sm:$0xff] %v490
                  %v492 = vld [vmem:[%s442 + $0xc0] sm:$0xff]
                  %493 = vst [vmem:[%s443 + $0xc0] sm:$0xff] %v492
                  %v494 = vld [vmem:[%s442 + $0xc8] sm:$0xff]
                  %495 = vst [vmem:[%s443 + $0xc8] sm:$0xff] %v494
                  %v496 = vld [vmem:[%s442 + $0xd0] sm:$0xff]
                  %497 = vst [vmem:[%s443 + $0xd0] sm:$0xff] %v496
                  %v498 = vld [vmem:[%s442 + $0xd8] sm:$0xff]
                  %499 = vst [vmem:[%s443 + $0xd8] sm:$0xff] %v498
                  %v500 = vld [vmem:[%s442 + $0xe0] sm:$0xff]
                  %501 = vst [vmem:[%s443 + $0xe0] sm:$0xff] %v500
                  %v502 = vld [vmem:[%s442 + $0xe8] sm:$0xff]
                  %503 = vst [vmem:[%s443 + $0xe8] sm:$0xff] %v502
                  %v504 = vld [vmem:[%s442 + $0xf0] sm:$0xff]
                  %505 = vst [vmem:[%s443 + $0xf0] sm:$0xff] %v504
                  %v506 = vld [vmem:[%s442 + $0xf8] sm:$0xff]
                  %507 = vst [vmem:[%s443 + $0xf8] sm:$0xff] %v506
                  %v508 = vld [vmem:[%s442 + $0x200] sm:$0xff]
                  %509 = vst [vmem:[%s443 + $0x100] sm:$0xff] %v508
                  %v510 = vld [vmem:[%s442 + $0x208] sm:$0xff]
                  %511 = vst [vmem:[%s443 + $0x108] sm:$0xff] %v510
                  %v512 = vld [vmem:[%s442 + $0x210] sm:$0xff]
                  %513 = vst [vmem:[%s443 + $0x110] sm:$0xff] %v512
                  %v514 = vld [vmem:[%s442 + $0x218] sm:$0xff]
                  %515 = vst [vmem:[%s443 + $0x118] sm:$0xff] %v514
                  %v516 = vld [vmem:[%s442 + $0x220] sm:$0xff]
                  %517 = vst [vmem:[%s443 + $0x120] sm:$0xff] %v516
                  %v518 = vld [vmem:[%s442 + $0x228] sm:$0xff]
                  %519 = vst [vmem:[%s443 + $0x128] sm:$0xff] %v518
                  %v520 = vld [vmem:[%s442 + $0x230] sm:$0xff]
                  %521 = vst [vmem:[%s443 + $0x130] sm:$0xff] %v520
                  %v522 = vld [vmem:[%s442 + $0x238] sm:$0xff]
                  %523 = vst [vmem:[%s443 + $0x138] sm:$0xff] %v522
                  %v524 = vld [vmem:[%s442 + $0x240] sm:$0xff]
                  %525 = vst [vmem:[%s443 + $0x140] sm:$0xff] %v524
                  %v526 = vld [vmem:[%s442 + $0x248] sm:$0xff]
                  %527 = vst [vmem:[%s443 + $0x148] sm:$0xff] %v526
                  %v528 = vld [vmem:[%s442 + $0x250] sm:$0xff]
                  %529 = vst [vmem:[%s443 + $0x150] sm:$0xff] %v528
                  %v530 = vld [vmem:[%s442 + $0x258] sm:$0xff]
                  %531 = vst [vmem:[%s443 + $0x158] sm:$0xff] %v530
                  %v532 = vld [vmem:[%s442 + $0x260] sm:$0xff]
                  %533 = vst [vmem:[%s443 + $0x160] sm:$0xff] %v532
                  %v534 = vld [vmem:[%s442 + $0x268] sm:$0xff]
                  %535 = vst [vmem:[%s443 + $0x168] sm:$0xff] %v534
                  %v536 = vld [vmem:[%s442 + $0x270] sm:$0xff]
                  %537 = vst [vmem:[%s443 + $0x170] sm:$0xff] %v536
                  %v538 = vld [vmem:[%s442 + $0x278] sm:$0xff]
                  %539 = vst [vmem:[%s443 + $0x178] sm:$0xff] %v538
                  %v540 = vld [vmem:[%s442 + $0x280] sm:$0xff]
                  %541 = vst [vmem:[%s443 + $0x180] sm:$0xff] %v540
                  %v542 = vld [vmem:[%s442 + $0x288] sm:$0xff]
                  %543 = vst [vmem:[%s443 + $0x188] sm:$0xff] %v542
                  %v544 = vld [vmem:[%s442 + $0x290] sm:$0xff]
                  %545 = vst [vmem:[%s443 + $0x190] sm:$0xff] %v544
                  %v546 = vld [vmem:[%s442 + $0x298] sm:$0xff]
                  %547 = vst [vmem:[%s443 + $0x198] sm:$0xff] %v546
                  %v548 = vld [vmem:[%s442 + $0x2a0] sm:$0xff]
                  %549 = vst [vmem:[%s443 + $0x1a0] sm:$0xff] %v548
                  %v550 = vld [vmem:[%s442 + $0x2a8] sm:$0xff]
                  %551 = vst [vmem:[%s443 + $0x1a8] sm:$0xff] %v550
                  %v552 = vld [vmem:[%s442 + $0x2b0] sm:$0xff]
                  %553 = vst [vmem:[%s443 + $0x1b0] sm:$0xff] %v552
                  %v554 = vld [vmem:[%s442 + $0x2b8] sm:$0xff]
                  %555 = vst [vmem:[%s443 + $0x1b8] sm:$0xff] %v554
                  %v556 = vld [vmem:[%s442 + $0x2c0] sm:$0xff]
                  %557 = vst [vmem:[%s443 + $0x1c0] sm:$0xff] %v556
                  %v558 = vld [vmem:[%s442 + $0x2c8] sm:$0xff]
                  %559 = vst [vmem:[%s443 + $0x1c8] sm:$0xff] %v558
                  %v560 = vld [vmem:[%s442 + $0x2d0] sm:$0xff]
                  %561 = vst [vmem:[%s443 + $0x1d0] sm:$0xff] %v560
                  %v562 = vld [vmem:[%s442 + $0x2d8] sm:$0xff]
                  %563 = vst [vmem:[%s443 + $0x1d8] sm:$0xff] %v562
                  %v564 = vld [vmem:[%s442 + $0x2e0] sm:$0xff]
                  %565 = vst [vmem:[%s443 + $0x1e0] sm:$0xff] %v564
                  %v566 = vld [vmem:[%s442 + $0x2e8] sm:$0xff]
                  %567 = vst [vmem:[%s443 + $0x1e8] sm:$0xff] %v566
                  %v568 = vld [vmem:[%s442 + $0x2f0] sm:$0xff]
                  %569 = vst [vmem:[%s443 + $0x1f0] sm:$0xff] %v568
                  %v570 = vld [vmem:[%s442 + $0x2f8] sm:$0xff]
                  %571 = vst [vmem:[%s443 + $0x1f8] sm:$0xff] %v570
                  %v572 = vld [vmem:[%s442 + $0x400] sm:$0xff]
                  %573 = vst [vmem:[%s443 + $0x200] sm:$0xff] %v572
                  %v574 = vld [vmem:[%s442 + $0x408] sm:$0xff]
                  %575 = vst [vmem:[%s443 + $0x208] sm:$0xff] %v574
                  %v576 = vld [vmem:[%s442 + $0x410] sm:$0xff]
                  %577 = vst [vmem:[%s443 + $0x210] sm:$0xff] %v576
                  %v578 = vld [vmem:[%s442 + $0x418] sm:$0xff]
                  %579 = vst [vmem:[%s443 + $0x218] sm:$0xff] %v578
                  %v580 = vld [vmem:[%s442 + $0x420] sm:$0xff]
                  %581 = vst [vmem:[%s443 + $0x220] sm:$0xff] %v580
                  %v582 = vld [vmem:[%s442 + $0x428] sm:$0xff]
                  %583 = vst [vmem:[%s443 + $0x228] sm:$0xff] %v582
                  %v584 = vld [vmem:[%s442 + $0x430] sm:$0xff]
                  %585 = vst [vmem:[%s443 + $0x230] sm:$0xff] %v584
                  %v586 = vld [vmem:[%s442 + $0x438] sm:$0xff]
                  %587 = vst [vmem:[%s443 + $0x238] sm:$0xff] %v586
                  %v588 = vld [vmem:[%s442 + $0x440] sm:$0xff]
                  %589 = vst [vmem:[%s443 + $0x240] sm:$0xff] %v588
                  %v590 = vld [vmem:[%s442 + $0x448] sm:$0xff]
                  %591 = vst [vmem:[%s443 + $0x248] sm:$0xff] %v590
                  %v592 = vld [vmem:[%s442 + $0x450] sm:$0xff]
                  %593 = vst [vmem:[%s443 + $0x250] sm:$0xff] %v592
                  %v594 = vld [vmem:[%s442 + $0x458] sm:$0xff]
                  %595 = vst [vmem:[%s443 + $0x258] sm:$0xff] %v594
                  %v596 = vld [vmem:[%s442 + $0x460] sm:$0xff]
                  %597 = vst [vmem:[%s443 + $0x260] sm:$0xff] %v596
                  %v598 = vld [vmem:[%s442 + $0x468] sm:$0xff]
                  %599 = vst [vmem:[%s443 + $0x268] sm:$0xff] %v598
                  %v600 = vld [vmem:[%s442 + $0x470] sm:$0xff]
                  %601 = vst [vmem:[%s443 + $0x270] sm:$0xff] %v600
                  %v602 = vld [vmem:[%s442 + $0x478] sm:$0xff]
                  %603 = vst [vmem:[%s443 + $0x278] sm:$0xff] %v602
                  %v604 = vld [vmem:[%s442 + $0x480] sm:$0xff]
                  %605 = vst [vmem:[%s443 + $0x280] sm:$0xff] %v604
                  %v606 = vld [vmem:[%s442 + $0x488] sm:$0xff]
                  %607 = vst [vmem:[%s443 + $0x288] sm:$0xff] %v606
                  %v608 = vld [vmem:[%s442 + $0x490] sm:$0xff]
                  %609 = vst [vmem:[%s443 + $0x290] sm:$0xff] %v608
                  %v610 = vld [vmem:[%s442 + $0x498] sm:$0xff]
                  %611 = vst [vmem:[%s443 + $0x298] sm:$0xff] %v610
                  %v612 = vld [vmem:[%s442 + $0x4a0] sm:$0xff]
                  %613 = vst [vmem:[%s443 + $0x2a0] sm:$0xff] %v612
                  %v614 = vld [vmem:[%s442 + $0x4a8] sm:$0xff]
                  %615 = vst [vmem:[%s443 + $0x2a8] sm:$0xff] %v614
                  %v616 = vld [vmem:[%s442 + $0x4b0] sm:$0xff]
                  %617 = vst [vmem:[%s443 + $0x2b0] sm:$0xff] %v616
                  %v618 = vld [vmem:[%s442 + $0x4b8] sm:$0xff]
                  %619 = vst [vmem:[%s443 + $0x2b8] sm:$0xff] %v618
                  %v620 = vld [vmem:[%s442 + $0x4c0] sm:$0xff]
                  %621 = vst [vmem:[%s443 + $0x2c0] sm:$0xff] %v620
                  %v622 = vld [vmem:[%s442 + $0x4c8] sm:$0xff]
                  %623 = vst [vmem:[%s443 + $0x2c8] sm:$0xff] %v622
                  %v624 = vld [vmem:[%s442 + $0x4d0] sm:$0xff]
                  %625 = vst [vmem:[%s443 + $0x2d0] sm:$0xff] %v624
                  %v626 = vld [vmem:[%s442 + $0x4d8] sm:$0xff]
                  %627 = vst [vmem:[%s443 + $0x2d8] sm:$0xff] %v626
                  %v628 = vld [vmem:[%s442 + $0x4e0] sm:$0xff]
                  %629 = vst [vmem:[%s443 + $0x2e0] sm:$0xff] %v628
                  %v630 = vld [vmem:[%s442 + $0x4e8] sm:$0xff]
                  %631 = vst [vmem:[%s443 + $0x2e8] sm:$0xff] %v630
                  %v632 = vld [vmem:[%s442 + $0x4f0] sm:$0xff]
                  %633 = vst [vmem:[%s443 + $0x2f0] sm:$0xff] %v632
                  %v634 = vld [vmem:[%s442 + $0x4f8] sm:$0xff]
                  %635 = vst [vmem:[%s443 + $0x2f8] sm:$0xff] %v634
                  %v636 = vld [vmem:[%s442 + $0x600] sm:$0xff]
                  %637 = vst [vmem:[%s443 + $0x300] sm:$0xff] %v636
                  %v638 = vld [vmem:[%s442 + $0x608] sm:$0xff]
                  %639 = vst [vmem:[%s443 + $0x308] sm:$0xff] %v638
                  %v640 = vld [vmem:[%s442 + $0x610] sm:$0xff]
                  %641 = vst [vmem:[%s443 + $0x310] sm:$0xff] %v640
                  %v642 = vld [vmem:[%s442 + $0x618] sm:$0xff]
                  %643 = vst [vmem:[%s443 + $0x318] sm:$0xff] %v642
                  %v644 = vld [vmem:[%s442 + $0x620] sm:$0xff]
                  %645 = vst [vmem:[%s443 + $0x320] sm:$0xff] %v644
                  %v646 = vld [vmem:[%s442 + $0x628] sm:$0xff]
                  %647 = vst [vmem:[%s443 + $0x328] sm:$0xff] %v646
                  %v648 = vld [vmem:[%s442 + $0x630] sm:$0xff]
                  %649 = vst [vmem:[%s443 + $0x330] sm:$0xff] %v648
                  %v650 = vld [vmem:[%s442 + $0x638] sm:$0xff]
                  %651 = vst [vmem:[%s443 + $0x338] sm:$0xff] %v650
                  %v652 = vld [vmem:[%s442 + $0x640] sm:$0xff]
                  %653 = vst [vmem:[%s443 + $0x340] sm:$0xff] %v652
                  %v654 = vld [vmem:[%s442 + $0x648] sm:$0xff]
                  %655 = vst [vmem:[%s443 + $0x348] sm:$0xff] %v654
                  %v656 = vld [vmem:[%s442 + $0x650] sm:$0xff]
                  %657 = vst [vmem:[%s443 + $0x350] sm:$0xff] %v656
                  %v658 = vld [vmem:[%s442 + $0x658] sm:$0xff]
                  %659 = vst [vmem:[%s443 + $0x358] sm:$0xff] %v658
                  %v660 = vld [vmem:[%s442 + $0x660] sm:$0xff]
                  %661 = vst [vmem:[%s443 + $0x360] sm:$0xff] %v660
                  %v662 = vld [vmem:[%s442 + $0x668] sm:$0xff]
                  %663 = vst [vmem:[%s443 + $0x368] sm:$0xff] %v662
                  %v664 = vld [vmem:[%s442 + $0x670] sm:$0xff]
                  %665 = vst [vmem:[%s443 + $0x370] sm:$0xff] %v664
                  %v666 = vld [vmem:[%s442 + $0x678] sm:$0xff]
                  %667 = vst [vmem:[%s443 + $0x378] sm:$0xff] %v666
                  %v668 = vld [vmem:[%s442 + $0x680] sm:$0xff]
                  %669 = vst [vmem:[%s443 + $0x380] sm:$0xff] %v668
                  %v670 = vld [vmem:[%s442 + $0x688] sm:$0xff]
                  %671 = vst [vmem:[%s443 + $0x388] sm:$0xff] %v670
                  %v672 = vld [vmem:[%s442 + $0x690] sm:$0xff]
                  %673 = vst [vmem:[%s443 + $0x390] sm:$0xff] %v672
                  %v674 = vld [vmem:[%s442 + $0x698] sm:$0xff]
                  %675 = vst [vmem:[%s443 + $0x398] sm:$0xff] %v674
                  %v676 = vld [vmem:[%s442 + $0x6a0] sm:$0xff]
                  %677 = vst [vmem:[%s443 + $0x3a0] sm:$0xff] %v676
                  %v678 = vld [vmem:[%s442 + $0x6a8] sm:$0xff]
                  %679 = vst [vmem:[%s443 + $0x3a8] sm:$0xff] %v678
                  %v680 = vld [vmem:[%s442 + $0x6b0] sm:$0xff]
                  %681 = vst [vmem:[%s443 + $0x3b0] sm:$0xff] %v680
                  %v682 = vld [vmem:[%s442 + $0x6b8] sm:$0xff]
                  %683 = vst [vmem:[%s443 + $0x3b8] sm:$0xff] %v682
                  %v684 = vld [vmem:[%s442 + $0x6c0] sm:$0xff]
                  %685 = vst [vmem:[%s443 + $0x3c0] sm:$0xff] %v684
                  %v686 = vld [vmem:[%s442 + $0x6c8] sm:$0xff]
                  %687 = vst [vmem:[%s443 + $0x3c8] sm:$0xff] %v686
                  %v688 = vld [vmem:[%s442 + $0x6d0] sm:$0xff]
                  %689 = vst [vmem:[%s443 + $0x3d0] sm:$0xff] %v688
                  %v690 = vld [vmem:[%s442 + $0x6d8] sm:$0xff]
                  %691 = vst [vmem:[%s443 + $0x3d8] sm:$0xff] %v690
                  %v692 = vld [vmem:[%s442 + $0x6e0] sm:$0xff]
                  %693 = vst [vmem:[%s443 + $0x3e0] sm:$0xff] %v692
                  %v694 = vld [vmem:[%s442 + $0x6e8] sm:$0xff]
                  %695 = vst [vmem:[%s443 + $0x3e8] sm:$0xff] %v694
                  %v696 = vld [vmem:[%s442 + $0x6f0] sm:$0xff]
                  %697 = vst [vmem:[%s443 + $0x3f0] sm:$0xff] %v696
                  %v698 = vld [vmem:[%s442 + $0x6f8] sm:$0xff]
                  %699 = vst [vmem:[%s443 + $0x3f8] sm:$0xff] %v698
                $region60: #{tpu_custom_call.1} parent=54 // loop_footer
                  %s441 = sadd.s32 1, %s437
                $region61: #{tpu_custom_call.1} parent=54 // loop_footer_branch
                  %436 = sbr.rel target = $region57
                $region62: #{tpu_custom_call.1} parent=54 // loop_exit
                  _
              $region55: #{tpu_custom_call.1} parent=39 // pred_fallthru
                _
              // Predicated region
              $region63: #{tpu_custom_call.1} parent=39 // pred_check
                _
              $region64: #{tpu_custom_call.1} parent=39 // pred_check_branch
                %701 = sbr.rel target = $region66
              $region65: #{tpu_custom_call.1} parent=39 // pred_region
                _
              $region66: #{tpu_custom_call.1} parent=39 // pred_fallthru
                _
            $region40: #{tpu_custom_call.1} parent=35 // pred_fallthru
              _
            // Predicated region
            $region41: #{tpu_custom_call.1} parent=35 // pred_check
              _
            $region42: #{tpu_custom_call.1} parent=35 // pred_check_branch
              %168 = sbr.rel target = $region44
            $region43: #{tpu_custom_call.1} parent=35 // pred_region
              loop: start=0, step=1, limit=1
              $region45: #{tpu_custom_call.1} parent=43 // loop_pre_header
                _
              $region46: #{tpu_custom_call.1} parent=43 // loop_header
                %s171 = sphi 0, %s175
                %p172 = scmp.ge.s32.totalorder %s171, 1
                %s176 = sphi %s162, %s162
                %s177 = sphi %s159, %s159
              $region47: #{tpu_custom_call.1} parent=43 // loop_header_branch
                %174 = sbr.rel (%p172) target = $region51
              $region48: #{tpu_custom_call.1} parent=43 // loop_body
                %v178 = vld [vmem:[%s176] sm:$0xff]
                %179 = vst [vmem:[%s177] sm:$0xff] %v178
                %v180 = vld [vmem:[%s176 + $0x8] sm:$0xff]
                %181 = vst [vmem:[%s177 + $0x8] sm:$0xff] %v180
                %v182 = vld [vmem:[%s176 + $0x10] sm:$0xff]
                %183 = vst [vmem:[%s177 + $0x10] sm:$0xff] %v182
                %v184 = vld [vmem:[%s176 + $0x18] sm:$0xff]
                %185 = vst [vmem:[%s177 + $0x18] sm:$0xff] %v184
                %v186 = vld [vmem:[%s176 + $0x20] sm:$0xff]
                %187 = vst [vmem:[%s177 + $0x20] sm:$0xff] %v186
                %v188 = vld [vmem:[%s176 + $0x28] sm:$0xff]
                %189 = vst [vmem:[%s177 + $0x28] sm:$0xff] %v188
                %v190 = vld [vmem:[%s176 + $0x30] sm:$0xff]
                %191 = vst [vmem:[%s177 + $0x30] sm:$0xff] %v190
                %v192 = vld [vmem:[%s176 + $0x38] sm:$0xff]
                %193 = vst [vmem:[%s177 + $0x38] sm:$0xff] %v192
                %v194 = vld [vmem:[%s176 + $0x40] sm:$0xff]
                %195 = vst [vmem:[%s177 + $0x40] sm:$0xff] %v194
                %v196 = vld [vmem:[%s176 + $0x48] sm:$0xff]
                %197 = vst [vmem:[%s177 + $0x48] sm:$0xff] %v196
                %v198 = vld [vmem:[%s176 + $0x50] sm:$0xff]
                %199 = vst [vmem:[%s177 + $0x50] sm:$0xff] %v198
                %v200 = vld [vmem:[%s176 + $0x58] sm:$0xff]
                %201 = vst [vmem:[%s177 + $0x58] sm:$0xff] %v200
                %v202 = vld [vmem:[%s176 + $0x60] sm:$0xff]
                %203 = vst [vmem:[%s177 + $0x60] sm:$0xff] %v202
                %v204 = vld [vmem:[%s176 + $0x68] sm:$0xff]
                %205 = vst [vmem:[%s177 + $0x68] sm:$0xff] %v204
                %v206 = vld [vmem:[%s176 + $0x70] sm:$0xff]
                %207 = vst [vmem:[%s177 + $0x70] sm:$0xff] %v206
                %v208 = vld [vmem:[%s176 + $0x78] sm:$0xff]
                %209 = vst [vmem:[%s177 + $0x78] sm:$0xff] %v208
                %v210 = vld [vmem:[%s176 + $0x80] sm:$0xff]
                %211 = vst [vmem:[%s177 + $0x80] sm:$0xff] %v210
                %v212 = vld [vmem:[%s176 + $0x88] sm:$0xff]
                %213 = vst [vmem:[%s177 + $0x88] sm:$0xff] %v212
                %v214 = vld [vmem:[%s176 + $0x90] sm:$0xff]
                %215 = vst [vmem:[%s177 + $0x90] sm:$0xff] %v214
                %v216 = vld [vmem:[%s176 + $0x98] sm:$0xff]
                %217 = vst [vmem:[%s177 + $0x98] sm:$0xff] %v216
                %v218 = vld [vmem:[%s176 + $0xa0] sm:$0xff]
                %219 = vst [vmem:[%s177 + $0xa0] sm:$0xff] %v218
                %v220 = vld [vmem:[%s176 + $0xa8] sm:$0xff]
                %221 = vst [vmem:[%s177 + $0xa8] sm:$0xff] %v220
                %v222 = vld [vmem:[%s176 + $0xb0] sm:$0xff]
                %223 = vst [vmem:[%s177 + $0xb0] sm:$0xff] %v222
                %v224 = vld [vmem:[%s176 + $0xb8] sm:$0xff]
                %225 = vst [vmem:[%s177 + $0xb8] sm:$0xff] %v224
                %v226 = vld [vmem:[%s176 + $0xc0] sm:$0xff]
                %227 = vst [vmem:[%s177 + $0xc0] sm:$0xff] %v226
                %v228 = vld [vmem:[%s176 + $0xc8] sm:$0xff]
                %229 = vst [vmem:[%s177 + $0xc8] sm:$0xff] %v228
                %v230 = vld [vmem:[%s176 + $0xd0] sm:$0xff]
                %231 = vst [vmem:[%s177 + $0xd0] sm:$0xff] %v230
                %v232 = vld [vmem:[%s176 + $0xd8] sm:$0xff]
                %233 = vst [vmem:[%s177 + $0xd8] sm:$0xff] %v232
                %v234 = vld [vmem:[%s176 + $0xe0] sm:$0xff]
                %235 = vst [vmem:[%s177 + $0xe0] sm:$0xff] %v234
                %v236 = vld [vmem:[%s176 + $0xe8] sm:$0xff]
                %237 = vst [vmem:[%s177 + $0xe8] sm:$0xff] %v236
                %v238 = vld [vmem:[%s176 + $0xf0] sm:$0xff]
                %239 = vst [vmem:[%s177 + $0xf0] sm:$0xff] %v238
                %v240 = vld [vmem:[%s176 + $0xf8] sm:$0xff]
                %241 = vst [vmem:[%s177 + $0xf8] sm:$0xff] %v240
                %v242 = vld [vmem:[%s176 + $0x200] sm:$0xff]
                %243 = vst [vmem:[%s177 + $0x100] sm:$0xff] %v242
                %v244 = vld [vmem:[%s176 + $0x208] sm:$0xff]
                %245 = vst [vmem:[%s177 + $0x108] sm:$0xff] %v244
                %v246 = vld [vmem:[%s176 + $0x210] sm:$0xff]
                %247 = vst [vmem:[%s177 + $0x110] sm:$0xff] %v246
                %v248 = vld [vmem:[%s176 + $0x218] sm:$0xff]
                %249 = vst [vmem:[%s177 + $0x118] sm:$0xff] %v248
                %v250 = vld [vmem:[%s176 + $0x220] sm:$0xff]
                %251 = vst [vmem:[%s177 + $0x120] sm:$0xff] %v250
                %v252 = vld [vmem:[%s176 + $0x228] sm:$0xff]
                %253 = vst [vmem:[%s177 + $0x128] sm:$0xff] %v252
                %v254 = vld [vmem:[%s176 + $0x230] sm:$0xff]
                %255 = vst [vmem:[%s177 + $0x130] sm:$0xff] %v254
                %v256 = vld [vmem:[%s176 + $0x238] sm:$0xff]
                %257 = vst [vmem:[%s177 + $0x138] sm:$0xff] %v256
                %v258 = vld [vmem:[%s176 + $0x240] sm:$0xff]
                %259 = vst [vmem:[%s177 + $0x140] sm:$0xff] %v258
                %v260 = vld [vmem:[%s176 + $0x248] sm:$0xff]
                %261 = vst [vmem:[%s177 + $0x148] sm:$0xff] %v260
                %v262 = vld [vmem:[%s176 + $0x250] sm:$0xff]
                %263 = vst [vmem:[%s177 + $0x150] sm:$0xff] %v262
                %v264 = vld [vmem:[%s176 + $0x258] sm:$0xff]
                %265 = vst [vmem:[%s177 + $0x158] sm:$0xff] %v264
                %v266 = vld [vmem:[%s176 + $0x260] sm:$0xff]
                %267 = vst [vmem:[%s177 + $0x160] sm:$0xff] %v266
                %v268 = vld [vmem:[%s176 + $0x268] sm:$0xff]
                %269 = vst [vmem:[%s177 + $0x168] sm:$0xff] %v268
                %v270 = vld [vmem:[%s176 + $0x270] sm:$0xff]
                %271 = vst [vmem:[%s177 + $0x170] sm:$0xff] %v270
                %v272 = vld [vmem:[%s176 + $0x278] sm:$0xff]
                %273 = vst [vmem:[%s177 + $0x178] sm:$0xff] %v272
                %v274 = vld [vmem:[%s176 + $0x280] sm:$0xff]
                %275 = vst [vmem:[%s177 + $0x180] sm:$0xff] %v274
                %v276 = vld [vmem:[%s176 + $0x288] sm:$0xff]
                %277 = vst [vmem:[%s177 + $0x188] sm:$0xff] %v276
                %v278 = vld [vmem:[%s176 + $0x290] sm:$0xff]
                %279 = vst [vmem:[%s177 + $0x190] sm:$0xff] %v278
                %v280 = vld [vmem:[%s176 + $0x298] sm:$0xff]
                %281 = vst [vmem:[%s177 + $0x198] sm:$0xff] %v280
                %v282 = vld [vmem:[%s176 + $0x2a0] sm:$0xff]
                %283 = vst [vmem:[%s177 + $0x1a0] sm:$0xff] %v282
                %v284 = vld [vmem:[%s176 + $0x2a8] sm:$0xff]
                %285 = vst [vmem:[%s177 + $0x1a8] sm:$0xff] %v284
                %v286 = vld [vmem:[%s176 + $0x2b0] sm:$0xff]
                %287 = vst [vmem:[%s177 + $0x1b0] sm:$0xff] %v286
                %v288 = vld [vmem:[%s176 + $0x2b8] sm:$0xff]
                %289 = vst [vmem:[%s177 + $0x1b8] sm:$0xff] %v288
                %v290 = vld [vmem:[%s176 + $0x2c0] sm:$0xff]
                %291 = vst [vmem:[%s177 + $0x1c0] sm:$0xff] %v290
                %v292 = vld [vmem:[%s176 + $0x2c8] sm:$0xff]
                %293 = vst [vmem:[%s177 + $0x1c8] sm:$0xff] %v292
                %v294 = vld [vmem:[%s176 + $0x2d0] sm:$0xff]
                %295 = vst [vmem:[%s177 + $0x1d0] sm:$0xff] %v294
                %v296 = vld [vmem:[%s176 + $0x2d8] sm:$0xff]
                %297 = vst [vmem:[%s177 + $0x1d8] sm:$0xff] %v296
                %v298 = vld [vmem:[%s176 + $0x2e0] sm:$0xff]
                %299 = vst [vmem:[%s177 + $0x1e0] sm:$0xff] %v298
                %v300 = vld [vmem:[%s176 + $0x2e8] sm:$0xff]
                %301 = vst [vmem:[%s177 + $0x1e8] sm:$0xff] %v300
                %v302 = vld [vmem:[%s176 + $0x2f0] sm:$0xff]
                %303 = vst [vmem:[%s177 + $0x1f0] sm:$0xff] %v302
                %v304 = vld [vmem:[%s176 + $0x2f8] sm:$0xff]
                %305 = vst [vmem:[%s177 + $0x1f8] sm:$0xff] %v304
                %v306 = vld [vmem:[%s176 + $0x400] sm:$0xff]
                %307 = vst [vmem:[%s177 + $0x200] sm:$0xff] %v306
                %v308 = vld [vmem:[%s176 + $0x408] sm:$0xff]
                %309 = vst [vmem:[%s177 + $0x208] sm:$0xff] %v308
                %v310 = vld [vmem:[%s176 + $0x410] sm:$0xff]
                %311 = vst [vmem:[%s177 + $0x210] sm:$0xff] %v310
                %v312 = vld [vmem:[%s176 + $0x418] sm:$0xff]
                %313 = vst [vmem:[%s177 + $0x218] sm:$0xff] %v312
                %v314 = vld [vmem:[%s176 + $0x420] sm:$0xff]
                %315 = vst [vmem:[%s177 + $0x220] sm:$0xff] %v314
                %v316 = vld [vmem:[%s176 + $0x428] sm:$0xff]
                %317 = vst [vmem:[%s177 + $0x228] sm:$0xff] %v316
                %v318 = vld [vmem:[%s176 + $0x430] sm:$0xff]
                %319 = vst [vmem:[%s177 + $0x230] sm:$0xff] %v318
                %v320 = vld [vmem:[%s176 + $0x438] sm:$0xff]
                %321 = vst [vmem:[%s177 + $0x238] sm:$0xff] %v320
                %v322 = vld [vmem:[%s176 + $0x440] sm:$0xff]
                %323 = vst [vmem:[%s177 + $0x240] sm:$0xff] %v322
                %v324 = vld [vmem:[%s176 + $0x448] sm:$0xff]
                %325 = vst [vmem:[%s177 + $0x248] sm:$0xff] %v324
                %v326 = vld [vmem:[%s176 + $0x450] sm:$0xff]
                %327 = vst [vmem:[%s177 + $0x250] sm:$0xff] %v326
                %v328 = vld [vmem:[%s176 + $0x458] sm:$0xff]
                %329 = vst [vmem:[%s177 + $0x258] sm:$0xff] %v328
                %v330 = vld [vmem:[%s176 + $0x460] sm:$0xff]
                %331 = vst [vmem:[%s177 + $0x260] sm:$0xff] %v330
                %v332 = vld [vmem:[%s176 + $0x468] sm:$0xff]
                %333 = vst [vmem:[%s177 + $0x268] sm:$0xff] %v332
                %v334 = vld [vmem:[%s176 + $0x470] sm:$0xff]
                %335 = vst [vmem:[%s177 + $0x270] sm:$0xff] %v334
                %v336 = vld [vmem:[%s176 + $0x478] sm:$0xff]
                %337 = vst [vmem:[%s177 + $0x278] sm:$0xff] %v336
                %v338 = vld [vmem:[%s176 + $0x480] sm:$0xff]
                %339 = vst [vmem:[%s177 + $0x280] sm:$0xff] %v338
                %v340 = vld [vmem:[%s176 + $0x488] sm:$0xff]
                %341 = vst [vmem:[%s177 + $0x288] sm:$0xff] %v340
                %v342 = vld [vmem:[%s176 + $0x490] sm:$0xff]
                %343 = vst [vmem:[%s177 + $0x290] sm:$0xff] %v342
                %v344 = vld [vmem:[%s176 + $0x498] sm:$0xff]
                %345 = vst [vmem:[%s177 + $0x298] sm:$0xff] %v344
                %v346 = vld [vmem:[%s176 + $0x4a0] sm:$0xff]
                %347 = vst [vmem:[%s177 + $0x2a0] sm:$0xff] %v346
                %v348 = vld [vmem:[%s176 + $0x4a8] sm:$0xff]
                %349 = vst [vmem:[%s177 + $0x2a8] sm:$0xff] %v348
                %v350 = vld [vmem:[%s176 + $0x4b0] sm:$0xff]
                %351 = vst [vmem:[%s177 + $0x2b0] sm:$0xff] %v350
                %v352 = vld [vmem:[%s176 + $0x4b8] sm:$0xff]
                %353 = vst [vmem:[%s177 + $0x2b8] sm:$0xff] %v352
                %v354 = vld [vmem:[%s176 + $0x4c0] sm:$0xff]
                %355 = vst [vmem:[%s177 + $0x2c0] sm:$0xff] %v354
                %v356 = vld [vmem:[%s176 + $0x4c8] sm:$0xff]
                %357 = vst [vmem:[%s177 + $0x2c8] sm:$0xff] %v356
                %v358 = vld [vmem:[%s176 + $0x4d0] sm:$0xff]
                %359 = vst [vmem:[%s177 + $0x2d0] sm:$0xff] %v358
                %v360 = vld [vmem:[%s176 + $0x4d8] sm:$0xff]
                %361 = vst [vmem:[%s177 + $0x2d8] sm:$0xff] %v360
                %v362 = vld [vmem:[%s176 + $0x4e0] sm:$0xff]
                %363 = vst [vmem:[%s177 + $0x2e0] sm:$0xff] %v362
                %v364 = vld [vmem:[%s176 + $0x4e8] sm:$0xff]
                %365 = vst [vmem:[%s177 + $0x2e8] sm:$0xff] %v364
                %v366 = vld [vmem:[%s176 + $0x4f0] sm:$0xff]
                %367 = vst [vmem:[%s177 + $0x2f0] sm:$0xff] %v366
                %v368 = vld [vmem:[%s176 + $0x4f8] sm:$0xff]
                %369 = vst [vmem:[%s177 + $0x2f8] sm:$0xff] %v368
                %v370 = vld [vmem:[%s176 + $0x600] sm:$0xff]
                %371 = vst [vmem:[%s177 + $0x300] sm:$0xff] %v370
                %v372 = vld [vmem:[%s176 + $0x608] sm:$0xff]
                %373 = vst [vmem:[%s177 + $0x308] sm:$0xff] %v372
                %v374 = vld [vmem:[%s176 + $0x610] sm:$0xff]
                %375 = vst [vmem:[%s177 + $0x310] sm:$0xff] %v374
                %v376 = vld [vmem:[%s176 + $0x618] sm:$0xff]
                %377 = vst [vmem:[%s177 + $0x318] sm:$0xff] %v376
                %v378 = vld [vmem:[%s176 + $0x620] sm:$0xff]
                %379 = vst [vmem:[%s177 + $0x320] sm:$0xff] %v378
                %v380 = vld [vmem:[%s176 + $0x628] sm:$0xff]
                %381 = vst [vmem:[%s177 + $0x328] sm:$0xff] %v380
                %v382 = vld [vmem:[%s176 + $0x630] sm:$0xff]
                %383 = vst [vmem:[%s177 + $0x330] sm:$0xff] %v382
                %v384 = vld [vmem:[%s176 + $0x638] sm:$0xff]
                %385 = vst [vmem:[%s177 + $0x338] sm:$0xff] %v384
                %v386 = vld [vmem:[%s176 + $0x640] sm:$0xff]
                %387 = vst [vmem:[%s177 + $0x340] sm:$0xff] %v386
                %v388 = vld [vmem:[%s176 + $0x648] sm:$0xff]
                %389 = vst [vmem:[%s177 + $0x348] sm:$0xff] %v388
                %v390 = vld [vmem:[%s176 + $0x650] sm:$0xff]
                %391 = vst [vmem:[%s177 + $0x350] sm:$0xff] %v390
                %v392 = vld [vmem:[%s176 + $0x658] sm:$0xff]
                %393 = vst [vmem:[%s177 + $0x358] sm:$0xff] %v392
                %v394 = vld [vmem:[%s176 + $0x660] sm:$0xff]
                %395 = vst [vmem:[%s177 + $0x360] sm:$0xff] %v394
                %v396 = vld [vmem:[%s176 + $0x668] sm:$0xff]
                %397 = vst [vmem:[%s177 + $0x368] sm:$0xff] %v396
                %v398 = vld [vmem:[%s176 + $0x670] sm:$0xff]
                %399 = vst [vmem:[%s177 + $0x370] sm:$0xff] %v398
                %v400 = vld [vmem:[%s176 + $0x678] sm:$0xff]
                %401 = vst [vmem:[%s177 + $0x378] sm:$0xff] %v400
                %v402 = vld [vmem:[%s176 + $0x680] sm:$0xff]
                %403 = vst [vmem:[%s177 + $0x380] sm:$0xff] %v402
                %v404 = vld [vmem:[%s176 + $0x688] sm:$0xff]
                %405 = vst [vmem:[%s177 + $0x388] sm:$0xff] %v404
                %v406 = vld [vmem:[%s176 + $0x690] sm:$0xff]
                %407 = vst [vmem:[%s177 + $0x390] sm:$0xff] %v406
                %v408 = vld [vmem:[%s176 + $0x698] sm:$0xff]
                %409 = vst [vmem:[%s177 + $0x398] sm:$0xff] %v408
                %v410 = vld [vmem:[%s176 + $0x6a0] sm:$0xff]
                %411 = vst [vmem:[%s177 + $0x3a0] sm:$0xff] %v410
                %v412 = vld [vmem:[%s176 + $0x6a8] sm:$0xff]
                %413 = vst [vmem:[%s177 + $0x3a8] sm:$0xff] %v412
                %v414 = vld [vmem:[%s176 + $0x6b0] sm:$0xff]
                %415 = vst [vmem:[%s177 + $0x3b0] sm:$0xff] %v414
                %v416 = vld [vmem:[%s176 + $0x6b8] sm:$0xff]
                %417 = vst [vmem:[%s177 + $0x3b8] sm:$0xff] %v416
                %v418 = vld [vmem:[%s176 + $0x6c0] sm:$0xff]
                %419 = vst [vmem:[%s177 + $0x3c0] sm:$0xff] %v418
                %v420 = vld [vmem:[%s176 + $0x6c8] sm:$0xff]
                %421 = vst [vmem:[%s177 + $0x3c8] sm:$0xff] %v420
                %v422 = vld [vmem:[%s176 + $0x6d0] sm:$0xff]
                %423 = vst [vmem:[%s177 + $0x3d0] sm:$0xff] %v422
                %v424 = vld [vmem:[%s176 + $0x6d8] sm:$0xff]
                %425 = vst [vmem:[%s177 + $0x3d8] sm:$0xff] %v424
                %v426 = vld [vmem:[%s176 + $0x6e0] sm:$0xff]
                %427 = vst [vmem:[%s177 + $0x3e0] sm:$0xff] %v426
                %v428 = vld [vmem:[%s176 + $0x6e8] sm:$0xff]
                %429 = vst [vmem:[%s177 + $0x3e8] sm:$0xff] %v428
                %v430 = vld [vmem:[%s176 + $0x6f0] sm:$0xff]
                %431 = vst [vmem:[%s177 + $0x3f0] sm:$0xff] %v430
                %v432 = vld [vmem:[%s176 + $0x6f8] sm:$0xff]
                %433 = vst [vmem:[%s177 + $0x3f8] sm:$0xff] %v432
              $region49: #{tpu_custom_call.1} parent=43 // loop_footer
                %s175 = sadd.s32 1, %s171
              $region50: #{tpu_custom_call.1} parent=43 // loop_footer_branch
                %170 = sbr.rel target = $region46
              $region51: #{tpu_custom_call.1} parent=43 // loop_exit
                _
            $region44: #{tpu_custom_call.1} parent=35 // pred_fallthru
              _
          $region36: #{tpu_custom_call.1} parent=31 // pred_fallthru
            _
          %702 = vnop
        $region32: #{tpu_custom_call.1} parent=27 // pred_fallthru
          _
      $region28: #{tpu_custom_call.1} parent=5 // pred_fallthru
        _
      %p703 = scmp.le.s32.totalorder 1, %s10
      %p704 = scmp.lt.s32.totalorder %s10, 3
      %p705 = pnand %p703, %p704
      %p706 = pneg %p705
      // Predicated region
      $region67: #{tpu_custom_call.1} parent=5 // pred_check
        _
      $region68: #{tpu_custom_call.1} parent=5 // pred_check_branch
        %708 = sbr.rel (%p705) target = $region70
      $region69: #{tpu_custom_call.1} parent=5 // pred_region
        %s709 = ssub.s32 %s10, 1
        %s710 = sand.u32 %s23, 1
        %s711 = sand.u32 %s23, 1
        %s712 = smul.addr %s711, 1024
        %s713 = scalar_lea.vmem [#allocation2], %s712
        // Predicated region
        $region71: #{tpu_custom_call.1} parent=69 // pred_check
          %p714 = pneg %p36
        $region72: #{tpu_custom_call.1} parent=69 // pred_check_branch
          %716 = sbr.rel (%p714) target = $region74
        $region73: #{tpu_custom_call.1} parent=69 // pred_region
          _
        $region74: #{tpu_custom_call.1} parent=69 // pred_fallthru
          _
        %s717 = sand.u32 %s23, 1
        %s718 = sand.u32 %s23, 1
        %s719 = smul.addr %s718, 1024
        %s720 = scalar_lea.vmem [#allocation2], %s719
        %p721 = pneg %p36
        %p722 = pneg %p33
        %p723 = pneg %p57
        %p724 = pneg %p54
        %p725 = pneg %p78
        %p726 = pneg %p75
        %p727 = pneg %p99
        %p728 = pneg %p96
        %p729 = pneg %p125
        %p730 = pneg %p122
        %s731 = smul.u32 32, %s15
        %p732 = scmp.lt.s32.totalorder %s731, 63
        %s733 = scalar_select %p732, %s731, 63
        %s734 = smul.addr %s733, 8
        %s735 = scalar_lea.vmem %s4, %s734
        %s736 = smul.u32 32, %s15
        %s737 = smul.u32 32, %s15
        %p738 = scmp.lt.s32.totalorder %s737, 63
        %s739 = scalar_select %p738, %s737, 63
        %s740 = smul.addr %s739, 8
        %s741 = scalar_lea.vmem %s4, %s740
        %s742 = smul.u32 32, %s15
        %v743 = vld [vmem:[%s1] sm:$0xff]
        %v744 = vld [vmem:[%s1 + $0x8] sm:$0xff]
        %v745 = vld [vmem:[%s1 + $0x10] sm:$0xff]
        %v746 = vld [vmem:[%s1 + $0x18] sm:$0x7]
        %v747 = vld [vmem:[%s2] sm:$0x1]
        %v748 = vld [vmem:[%s3] sm:$0x1]
        %v749 = vld [vmem:[%s713] sm:$0xff]
        %v750 = vld [vmem:[%s713 + $0x8] sm:$0xff]
        %v751 = vld [vmem:[%s713 + $0x10] sm:$0xff]
        %v752 = vld [vmem:[%s713 + $0x18] sm:$0xff]
        %v753 = vld [vmem:[%s713 + $0x20] sm:$0xff]
        %v754 = vld [vmem:[%s713 + $0x28] sm:$0xff]
        %v755 = vld [vmem:[%s713 + $0x30] sm:$0xff]
        %v756 = vld [vmem:[%s713 + $0x38] sm:$0xff]
        %v757 = vld [vmem:[%s713 + $0x40] sm:$0xff]
        %v758 = vld [vmem:[%s713 + $0x48] sm:$0xff]
        %v759 = vld [vmem:[%s713 + $0x50] sm:$0xff]
        %v760 = vld [vmem:[%s713 + $0x58] sm:$0xff]
        %v761 = vld [vmem:[%s713 + $0x60] sm:$0xff]
        %v762 = vld [vmem:[%s713 + $0x68] sm:$0xff]
        %v763 = vld [vmem:[%s713 + $0x70] sm:$0xff]
        %v764 = vld [vmem:[%s713 + $0x78] sm:$0xff]
        %v765 = vld [vmem:[%s713 + $0x80] sm:$0xff]
        %v766 = vld [vmem:[%s713 + $0x88] sm:$0xff]
        %v767 = vld [vmem:[%s713 + $0x90] sm:$0xff]
        %v768 = vld [vmem:[%s713 + $0x98] sm:$0xff]
        %v769 = vld [vmem:[%s713 + $0xa0] sm:$0xff]
        %v770 = vld [vmem:[%s713 + $0xa8] sm:$0xff]
        %v771 = vld [vmem:[%s713 + $0xb0] sm:$0xff]
        %v772 = vld [vmem:[%s713 + $0xb8] sm:$0xff]
        %v773 = vld [vmem:[%s713 + $0xc0] sm:$0xff]
        %v774 = vld [vmem:[%s713 + $0xc8] sm:$0xff]
        %v775 = vld [vmem:[%s713 + $0xd0] sm:$0xff]
        %v776 = vld [vmem:[%s713 + $0xd8] sm:$0xff]
        %v777 = vld [vmem:[%s713 + $0xe0] sm:$0xff]
        %v778 = vld [vmem:[%s713 + $0xe8] sm:$0xff]
        %v779 = vld [vmem:[%s713 + $0xf0] sm:$0xff]
        %v780 = vld [vmem:[%s713 + $0xf8] sm:$0xff]
        %vm781 = vcmask 220160
        %v783 = vsel %vm781, %v749, 0
        %v786 = vsel %vm781, %v750, 0
        %v789 = vsel %vm781, %v751, 0
        %v792 = vsel %vm781, %v752, 0
        %v795 = vsel %vm781, %v753, 0
        %v798 = vsel %vm781, %v754, 0
        %v801 = vsel %vm781, %v755, 0
        %v804 = vsel %vm781, %v756, 0
        %v807 = vsel %vm781, %v757, 0
        %v810 = vsel %vm781, %v758, 0
        %v813 = vsel %vm781, %v759, 0
        %v816 = vsel %vm781, %v760, 0
        %v819 = vsel %vm781, %v761, 0
        %v822 = vsel %vm781, %v762, 0
        %v825 = vsel %vm781, %v763, 0
        %v828 = vsel %vm781, %v764, 0
        %v831 = vsel %vm781, %v765, 0
        %v834 = vsel %vm781, %v766, 0
        %v837 = vsel %vm781, %v767, 0
        %v840 = vsel %vm781, %v768, 0
        %v843 = vsel %vm781, %v769, 0
        %v846 = vsel %vm781, %v770, 0
        %v849 = vsel %vm781, %v771, 0
        %v852 = vsel %vm781, %v772, 0
        %v855 = vsel %vm781, %v773, 0
        %v858 = vsel %vm781, %v774, 0
        %v861 = vsel %vm781, %v775, 0
        %v864 = vsel %vm781, %v776, 0
        %v867 = vsel %vm781, %v777, 0
        %v870 = vsel %vm781, %v778, 0
        %v873 = vsel %vm781, %v779, 0
        %v876 = vsel %vm781, %v780, 0
        %vm878 = vcmask 1042432
        %v880 = vsel %vm878, %v746, 0
        %882 = vmatprep.subr.mxu0 0.0
        %883 = vmatpush1.msra.mxu0 %v743
        %884 = vmatprep.subr.mxu0 0.0
        %885 = vmatpush1.msra.mxu0 %v744
        %886 = vmatprep.subr.mxu0 0.0
        %887 = vmatpush1.msra.mxu0 %v745
        %888 = vmatprep.subr.mxu0 0.0
        %889 = vmatpush1.msra.mxu0 %v880
        %890 = vmatprep.subr.mxu0 0.0
        %891 = vmatpush1.msra.mxu0 0.0
        %892 = vmatprep.subr.mxu0 0.0
        %893 = vmatpush1.msra.mxu0 0.0
        %894 = vmatprep.subr.mxu0 0.0
        %895 = vmatpush1.msra.mxu0 0.0
        %896 = vmatprep.subr.mxu0 0.0
        %897 = vmatpush1.msra.mxu0 0.0
        %898 = vmatprep.subr.mxu0 0.0
        %899 = vmatpush1.msra.mxu0 0.0
        %900 = vmatprep.subr.mxu0 0.0
        %901 = vmatpush1.msra.mxu0 0.0
        %902 = vmatprep.subr.mxu0 0.0
        %903 = vmatpush1.msra.mxu0 0.0
        %904 = vmatprep.subr.mxu0 0.0
        %905 = vmatpush1.msra.mxu0 0.0
        %906 = vmatprep.subr.mxu0 0.0
        %907 = vmatpush1.msra.mxu0 0.0
        %908 = vmatprep.subr.mxu0 0.0
        %909 = vmatpush1.msra.mxu0 0.0
        %910 = vmatprep.subr.mxu0 0.0
        %911 = vmatpush1.msra.mxu0 0.0
        %912 = vmatprep.subr.mxu0 0.0
        %913 = vmatpush1.msra.mxu0 0.0
        %914 = vmatprep.subr.mxu0 0.0
        %915 = vmatpush1.msra.mxu0 0.0
        %916 = vmatprep.subr.mxu0 0.0
        %917 = vmatpush1.msra.mxu0 0.0
        %918 = vmatprep.subr.mxu0 0.0
        %919 = vmatpush1.msra.mxu0 0.0
        %920 = vmatprep.subr.mxu0 0.0
        %921 = vmatpush1.msra.mxu0 0.0
        %922 = vmatprep.subr.mxu0 0.0
        %923 = vmatpush1.msra.mxu0 0.0
        %924 = vmatprep.subr.mxu0 0.0
        %925 = vmatpush1.msra.mxu0 0.0
        %926 = vmatprep.subr.mxu0 0.0
        %927 = vmatpush1.msra.mxu0 0.0
        %928 = vmatprep.subr.mxu0 0.0
        %929 = vmatpush1.msra.mxu0 0.0
        %930 = vmatprep.subr.mxu0 0.0
        %931 = vmatpush1.msra.mxu0 0.0
        %932 = vmatprep.subr.mxu0 0.0
        %933 = vmatpush1.msra.mxu0 0.0
        %934 = vmatprep.subr.mxu0 0.0
        %935 = vmatpush1.msra.mxu0 0.0
        %936 = vmatprep.subr.mxu0 0.0
        %937 = vmatpush1.msra.mxu0 0.0
        %938 = vmatprep.subr.mxu0 0.0
        %939 = vmatpush1.msra.mxu0 0.0
        %940 = vmatprep.subr.mxu0 0.0
        %941 = vmatpush1.msra.mxu0 0.0
        %942 = vmatprep.subr.mxu0 0.0
        %943 = vmatpush1.msra.mxu0 0.0
        %944 = vmatprep.subr.mxu0 0.0
        %945 = vmatpush1.msra.mxu0 0.0
        %946 = vmatprep.mubr.f32.mxu0 0.0
        %947 = vmatmul.mubr.f32.gmra.mrb[0].mxu0 %v783
        %v948 = vpop.f32.mrb[0].mxu0
        %v949 = vadd.f32 0.0, %v948
        %v950 = vpop.f32.mrb[0].mxu0
        %951 = vmatprep.mubr.f32.mxu0 0.0
        %952 = vmatmul.mubr.f32.gmra.mrb[0].mxu0 %v786
        %v953 = vpop.f32.mrb[0].mxu0
        %v954 = vadd.f32 0.0, %v953
        %v955 = vpop.f32.mrb[0].mxu0
        %956 = vmatprep.mubr.f32.mxu0 0.0
        %957 = vmatmul.mubr.f32.gmra.mrb[0].mxu0 %v789
        %v958 = vpop.f32.mrb[0].mxu0
        %v959 = vadd.f32 0.0, %v958
        %v960 = vpop.f32.mrb[0].mxu0
        %961 = vmatprep.mubr.f32.mxu0 0.0
        %962 = vmatmul.mubr.f32.gmra.mrb[0].mxu0 %v792
        %v963 = vpop.f32.mrb[0].mxu0
        %v964 = vadd.f32 0.0, %v963
        %v965 = vpop.f32.mrb[0].mxu0
        %966 = vmatprep.mubr.f32.mxu0 0.0
        %967 = vmatmul.mubr.f32.gmra.mrb[0].mxu0 %v795
        %v968 = vpop.f32.mrb[0].mxu0
        %v969 = vadd.f32 0.0, %v968
        %v970 = vpop.f32.mrb[0].mxu0
        %971 = vmatprep.mubr.f32.mxu0 0.0
        %972 = vmatmul.mubr.f32.gmra.mrb[0].mxu0 %v798
        %v973 = vpop.f32.mrb[0].mxu0
        %v974 = vadd.f32 0.0, %v973
        %v975 = vpop.f32.mrb[0].mxu0
        %976 = vmatprep.mubr.f32.mxu0 0.0
        %977 = vmatmul.mubr.f32.gmra.mrb[0].mxu0 %v801
        %v978 = vpop.f32.mrb[0].mxu0
        %v979 = vadd.f32 0.0, %v978
        %v980 = vpop.f32.mrb[0].mxu0
        %981 = vmatprep.mubr.f32.mxu0 0.0
        %982 = vmatmul.mubr.f32.gmra.mrb[0].mxu0 %v804
        %v983 = vpop.f32.mrb[0].mxu0
        %v984 = vadd.f32 0.0, %v983
        %v985 = vpop.f32.mrb[0].mxu0
        %986 = vmatprep.mubr.f32.mxu0 0.0
        %987 = vmatmul.mubr.f32.gmra.mrb[0].mxu0 %v807
        %v988 = vpop.f32.mrb[0].mxu0
        %v989 = vadd.f32 0.0, %v988
        %v990 = vpop.f32.mrb[0].mxu0
        %991 = vmatprep.mubr.f32.mxu0 0.0
        %992 = vmatmul.mubr.f32.gmra.mrb[0].mxu0 %v810
        %v993 = vpop.f32.mrb[0].mxu0
        %v994 = vadd.f32 0.0, %v993
        %v995 = vpop.f32.mrb[0].mxu0
        %996 = vmatprep.mubr.f32.mxu0 0.0
        %997 = vmatmul.mubr.f32.gmra.mrb[0].mxu0 %v813
        %v998 = vpop.f32.mrb[0].mxu0
        %v999 = vadd.f32 0.0, %v998
        %v1000 = vpop.f32.mrb[0].mxu0
        %1001 = vmatprep.mubr.f32.mxu0 0.0
        %1002 = vmatmul.mubr.f32.gmra.mrb[0].mxu0 %v816
        %v1003 = vpop.f32.mrb[0].mxu0
        %v1004 = vadd.f32 0.0, %v1003
        %v1005 = vpop.f32.mrb[0].mxu0
        %1006 = vmatprep.mubr.f32.mxu0 0.0
        %1007 = vmatmul.mubr.f32.gmra.mrb[0].mxu0 %v819
        %v1008 = vpop.f32.mrb[0].mxu0
        %v1009 = vadd.f32 0.0, %v1008
        %v1010 = vpop.f32.mrb[0].mxu0
        %1011 = vmatprep.mubr.f32.mxu0 0.0
        %1012 = vmatmul.mubr.f32.gmra.mrb[0].mxu0 %v822
        %v1013 = vpop.f32.mrb[0].mxu0
        %v1014 = vadd.f32 0.0, %v1013
        %v1015 = vpop.f32.mrb[0].mxu0
        %1016 = vmatprep.mubr.f32.mxu0 0.0
        %1017 = vmatmul.mubr.f32.gmra.mrb[0].mxu0 %v825
        %v1018 = vpop.f32.mrb[0].mxu0
        %v1019 = vadd.f32 0.0, %v1018
        %v1020 = vpop.f32.mrb[0].mxu0
        %1021 = vmatprep.mubr.f32.mxu0 0.0
        %1022 = vmatmul.mubr.f32.gmra.mrb[0].mxu0 %v828
        %v1023 = vpop.f32.mrb[0].mxu0
        %v1024 = vadd.f32 0.0, %v1023
        %v1025 = vpop.f32.mrb[0].mxu0
        %1026 = vmatprep.mubr.f32.mxu0 0.0
        %1027 = vmatmul.mubr.f32.gmra.mrb[0].mxu0 %v831
        %v1028 = vpop.f32.mrb[0].mxu0
        %v1029 = vadd.f32 0.0, %v1028
        %v1030 = vpop.f32.mrb[0].mxu0
        %1031 = vmatprep.mubr.f32.mxu0 0.0
        %1032 = vmatmul.mubr.f32.gmra.mrb[0].mxu0 %v834
        %v1033 = vpop.f32.mrb[0].mxu0
        %v1034 = vadd.f32 0.0, %v1033
        %v1035 = vpop.f32.mrb[0].mxu0
        %1036 = vmatprep.mubr.f32.mxu0 0.0
        %1037 = vmatmul.mubr.f32.gmra.mrb[0].mxu0 %v837
        %v1038 = vpop.f32.mrb[0].mxu0
        %v1039 = vadd.f32 0.0, %v1038
        %v1040 = vpop.f32.mrb[0].mxu0
        %1041 = vmatprep.mubr.f32.mxu0 0.0
        %1042 = vmatmul.mubr.f32.gmra.mrb[0].mxu0 %v840
        %v1043 = vpop.f32.mrb[0].mxu0
        %v1044 = vadd.f32 0.0, %v1043
        %v1045 = vpop.f32.mrb[0].mxu0
        %1046 = vmatprep.mubr.f32.mxu0 0.0
        %1047 = vmatmul.mubr.f32.gmra.mrb[0].mxu0 %v843
        %v1048 = vpop.f32.mrb[0].mxu0
        %v1049 = vadd.f32 0.0, %v1048
        %v1050 = vpop.f32.mrb[0].mxu0
        %1051 = vmatprep.mubr.f32.mxu0 0.0
        %1052 = vmatmul.mubr.f32.gmra.mrb[0].mxu0 %v846
        %v1053 = vpop.f32.mrb[0].mxu0
        %v1054 = vadd.f32 0.0, %v1053
        %v1055 = vpop.f32.mrb[0].mxu0
        %1056 = vmatprep.mubr.f32.mxu0 0.0
        %1057 = vmatmul.mubr.f32.gmra.mrb[0].mxu0 %v849
        %v1058 = vpop.f32.mrb[0].mxu0
        %v1059 = vadd.f32 0.0, %v1058
        %v1060 = vpop.f32.mrb[0].mxu0
        %1061 = vmatprep.mubr.f32.mxu0 0.0
        %1062 = vmatmul.mubr.f32.gmra.mrb[0].mxu0 %v852
        %v1063 = vpop.f32.mrb[0].mxu0
        %v1064 = vadd.f32 0.0, %v1063
        %v1065 = vpop.f32.mrb[0].mxu0
        %1066 = vmatprep.mubr.f32.mxu0 0.0
        %1067 = vmatmul.mubr.f32.gmra.mrb[0].mxu0 %v855
        %v1068 = vpop.f32.mrb[0].mxu0
        %v1069 = vadd.f32 0.0, %v1068
        %v1070 = vpop.f32.mrb[0].mxu0
        %1071 = vmatprep.mubr.f32.mxu0 0.0
        %1072 = vmatmul.mubr.f32.gmra.mrb[0].mxu0 %v858
        %v1073 = vpop.f32.mrb[0].mxu0
        %v1074 = vadd.f32 0.0, %v1073
        %v1075 = vpop.f32.mrb[0].mxu0
        %1076 = vmatprep.mubr.f32.mxu0 0.0
        %1077 = vmatmul.mubr.f32.gmra.mrb[0].mxu0 %v861
        %v1078 = vpop.f32.mrb[0].mxu0
        %v1079 = vadd.f32 0.0, %v1078
        %v1080 = vpop.f32.mrb[0].mxu0
        %1081 = vmatprep.mubr.f32.mxu0 0.0
        %1082 = vmatmul.mubr.f32.gmra.mrb[0].mxu0 %v864
        %v1083 = vpop.f32.mrb[0].mxu0
        %v1084 = vadd.f32 0.0, %v1083
        %v1085 = vpop.f32.mrb[0].mxu0
        %1086 = vmatprep.mubr.f32.mxu0 0.0
        %1087 = vmatmul.mubr.f32.gmra.mrb[0].mxu0 %v867
        %v1088 = vpop.f32.mrb[0].mxu0
        %v1089 = vadd.f32 0.0, %v1088
        %v1090 = vpop.f32.mrb[0].mxu0
        %1091 = vmatprep.mubr.f32.mxu0 0.0
        %1092 = vmatmul.mubr.f32.gmra.mrb[0].mxu0 %v870
        %v1093 = vpop.f32.mrb[0].mxu0
        %v1094 = vadd.f32 0.0, %v1093
        %v1095 = vpop.f32.mrb[0].mxu0
        %1096 = vmatprep.mubr.f32.mxu0 0.0
        %1097 = vmatmul.mubr.f32.gmra.mrb[0].mxu0 %v873
        %v1098 = vpop.f32.mrb[0].mxu0
        %v1099 = vadd.f32 0.0, %v1098
        %v1100 = vpop.f32.mrb[0].mxu0
        %1101 = vmatprep.mubr.f32.mxu0 0.0
        %1102 = vmatmul.mubr.f32.gmra.mrb[0].mxu0 %v876
        %v1103 = vpop.f32.mrb[0].mxu0
        %v1104 = vadd.f32 0.0, %v1103
        %v1105 = vpop.f32.mrb[0].mxu0
        %1106 = vdwg.mxu0
        %v1108 = vlaneseq
        %v1109 = vshrl.u32 %v1108, 7
        %v1110 = vsub.s32 0, %v1109
        %v1111 = vrot.slane %v747, %v1110
        %v1113 = vmul.f32 %v949, %v1111
        %v1114 = vmul.f32 %v954, %v1111
        %v1115 = vmul.f32 %v959, %v1111
        %v1116 = vmul.f32 %v964, %v1111
        %v1117 = vmul.f32 %v969, %v1111
        %v1118 = vmul.f32 %v974, %v1111
        %v1119 = vmul.f32 %v979, %v1111
        %v1120 = vmul.f32 %v984, %v1111
        %v1121 = vmul.f32 %v989, %v1111
        %v1122 = vmul.f32 %v994, %v1111
        %v1123 = vmul.f32 %v999, %v1111
        %v1124 = vmul.f32 %v1004, %v1111
        %v1125 = vmul.f32 %v1009, %v1111
        %v1126 = vmul.f32 %v1014, %v1111
        %v1127 = vmul.f32 %v1019, %v1111
        %v1128 = vmul.f32 %v1024, %v1111
        %v1129 = vmul.f32 %v1029, %v1111
        %v1130 = vmul.f32 %v1034, %v1111
        %v1131 = vmul.f32 %v1039, %v1111
        %v1132 = vmul.f32 %v1044, %v1111
        %v1133 = vmul.f32 %v1049, %v1111
        %v1134 = vmul.f32 %v1054, %v1111
        %v1135 = vmul.f32 %v1059, %v1111
        %v1136 = vmul.f32 %v1064, %v1111
        %v1137 = vmul.f32 %v1069, %v1111
        %v1138 = vmul.f32 %v1074, %v1111
        %v1139 = vmul.f32 %v1079, %v1111
        %v1140 = vmul.f32 %v1084, %v1111
        %v1141 = vmul.f32 %v1089, %v1111
        %v1142 = vmul.f32 %v1094, %v1111
        %v1143 = vmul.f32 %v1099, %v1111
        %v1144 = vmul.f32 %v1104, %v1111
        %v1146 = vlaneseq
        %v1147 = vshrl.u32 %v1146, 7
        %v1148 = vsub.s32 0, %v1147
        %v1149 = vrot.slane %v748, %v1148
        %v1151 = vadd.f32 %v1113, %v1149
        %v1152 = vadd.f32 %v1114, %v1149
        %v1153 = vadd.f32 %v1115, %v1149
        %v1154 = vadd.f32 %v1116, %v1149
        %v1155 = vadd.f32 %v1117, %v1149
        %v1156 = vadd.f32 %v1118, %v1149
        %v1157 = vadd.f32 %v1119, %v1149
        %v1158 = vadd.f32 %v1120, %v1149
        %v1159 = vadd.f32 %v1121, %v1149
        %v1160 = vadd.f32 %v1122, %v1149
        %v1161 = vadd.f32 %v1123, %v1149
        %v1162 = vadd.f32 %v1124, %v1149
        %v1163 = vadd.f32 %v1125, %v1149
        %v1164 = vadd.f32 %v1126, %v1149
        %v1165 = vadd.f32 %v1127, %v1149
        %v1166 = vadd.f32 %v1128, %v1149
        %v1167 = vadd.f32 %v1129, %v1149
        %v1168 = vadd.f32 %v1130, %v1149
        %v1169 = vadd.f32 %v1131, %v1149
        %v1170 = vadd.f32 %v1132, %v1149
        %v1171 = vadd.f32 %v1133, %v1149
        %v1172 = vadd.f32 %v1134, %v1149
        %v1173 = vadd.f32 %v1135, %v1149
        %v1174 = vadd.f32 %v1136, %v1149
        %v1175 = vadd.f32 %v1137, %v1149
        %v1176 = vadd.f32 %v1138, %v1149
        %v1177 = vadd.f32 %v1139, %v1149
        %v1178 = vadd.f32 %v1140, %v1149
        %v1179 = vadd.f32 %v1141, %v1149
        %v1180 = vadd.f32 %v1142, %v1149
        %v1181 = vadd.f32 %v1143, %v1149
        %v1182 = vadd.f32 %v1144, %v1149
        %v1183 = vmax.f32 %v1151, 0.0
        %v1184 = vmax.f32 %v1152, 0.0
        %v1185 = vmax.f32 %v1153, 0.0
        %v1186 = vmax.f32 %v1154, 0.0
        %v1187 = vmax.f32 %v1155, 0.0
        %v1188 = vmax.f32 %v1156, 0.0
        %v1189 = vmax.f32 %v1157, 0.0
        %v1190 = vmax.f32 %v1158, 0.0
        %v1191 = vmax.f32 %v1159, 0.0
        %v1192 = vmax.f32 %v1160, 0.0
        %v1193 = vmax.f32 %v1161, 0.0
        %v1194 = vmax.f32 %v1162, 0.0
        %v1195 = vmax.f32 %v1163, 0.0
        %v1196 = vmax.f32 %v1164, 0.0
        %v1197 = vmax.f32 %v1165, 0.0
        %v1198 = vmax.f32 %v1166, 0.0
        %v1199 = vmax.f32 %v1167, 0.0
        %v1200 = vmax.f32 %v1168, 0.0
        %v1201 = vmax.f32 %v1169, 0.0
        %v1202 = vmax.f32 %v1170, 0.0
        %v1203 = vmax.f32 %v1171, 0.0
        %v1204 = vmax.f32 %v1172, 0.0
        %v1205 = vmax.f32 %v1173, 0.0
        %v1206 = vmax.f32 %v1174, 0.0
        %v1207 = vmax.f32 %v1175, 0.0
        %v1208 = vmax.f32 %v1176, 0.0
        %v1209 = vmax.f32 %v1177, 0.0
        %v1210 = vmax.f32 %v1178, 0.0
        %v1211 = vmax.f32 %v1179, 0.0
        %v1212 = vmax.f32 %v1180, 0.0
        %v1213 = vmax.f32 %v1181, 0.0
        %v1214 = vmax.f32 %v1182, 0.0
        %s1215 = scalar_lea.vmem %s713, 256 [#allocation2]
        %v1216 = vld [vmem:[%s1215] sm:$0xff]
        %v1217 = vld [vmem:[%s1215 + $0x8] sm:$0xff]
        %v1218 = vld [vmem:[%s1215 + $0x10] sm:$0xff]
        %v1219 = vld [vmem:[%s1215 + $0x18] sm:$0xff]
        %v1220 = vld [vmem:[%s1215 + $0x20] sm:$0xff]
        %v1221 = vld [vmem:[%s1215 + $0x28] sm:$0xff]
        %v1222 = vld [vmem:[%s1215 + $0x30] sm:$0xff]
        %v1223 = vld [vmem:[%s1215 + $0x38] sm:$0xff]
        %v1224 = vld [vmem:[%s1215 + $0x40] sm:$0xff]
        %v1225 = vld [vmem:[%s1215 + $0x48] sm:$0xff]
        %v1226 = vld [vmem:[%s1215 + $0x50] sm:$0xff]
        %v1227 = vld [vmem:[%s1215 + $0x58] sm:$0xff]
        %v1228 = vld [vmem:[%s1215 + $0x60] sm:$0xff]
        %v1229 = vld [vmem:[%s1215 + $0x68] sm:$0xff]
        %v1230 = vld [vmem:[%s1215 + $0x70] sm:$0xff]
        %v1231 = vld [vmem:[%s1215 + $0x78] sm:$0xff]
        %v1232 = vld [vmem:[%s1215 + $0x80] sm:$0xff]
        %v1233 = vld [vmem:[%s1215 + $0x88] sm:$0xff]
        %v1234 = vld [vmem:[%s1215 + $0x90] sm:$0xff]
        %v1235 = vld [vmem:[%s1215 + $0x98] sm:$0xff]
        %v1236 = vld [vmem:[%s1215 + $0xa0] sm:$0xff]
        %v1237 = vld [vmem:[%s1215 + $0xa8] sm:$0xff]
        %v1238 = vld [vmem:[%s1215 + $0xb0] sm:$0xff]
        %v1239 = vld [vmem:[%s1215 + $0xb8] sm:$0xff]
        %v1240 = vld [vmem:[%s1215 + $0xc0] sm:$0xff]
        %v1241 = vld [vmem:[%s1215 + $0xc8] sm:$0xff]
        %v1242 = vld [vmem:[%s1215 + $0xd0] sm:$0xff]
        %v1243 = vld [vmem:[%s1215 + $0xd8] sm:$0xff]
        %v1244 = vld [vmem:[%s1215 + $0xe0] sm:$0xff]
        %v1245 = vld [vmem:[%s1215 + $0xe8] sm:$0xff]
        %v1246 = vld [vmem:[%s1215 + $0xf0] sm:$0xff]
        %v1247 = vld [vmem:[%s1215 + $0xf8] sm:$0xff]
        %v1249 = vsel %vm781, %v1216, 0
        %v1252 = vsel %vm781, %v1217, 0
        %v1255 = vsel %vm781, %v1218, 0
        %v1258 = vsel %vm781, %v1219, 0
        %v1261 = vsel %vm781, %v1220, 0
        %v1264 = vsel %vm781, %v1221, 0
        %v1267 = vsel %vm781, %v1222, 0
        %v1270 = vsel %vm781, %v1223, 0
        %v1273 = vsel %vm781, %v1224, 0
        %v1276 = vsel %vm781, %v1225, 0
        %v1279 = vsel %vm781, %v1226, 0
        %v1282 = vsel %vm781, %v1227, 0
        %v1285 = vsel %vm781, %v1228, 0
        %v1288 = vsel %vm781, %v1229, 0
        %v1291 = vsel %vm781, %v1230, 0
        %v1294 = vsel %vm781, %v1231, 0
        %v1297 = vsel %vm781, %v1232, 0
        %v1300 = vsel %vm781, %v1233, 0
        %v1303 = vsel %vm781, %v1234, 0
        %v1306 = vsel %vm781, %v1235, 0
        %v1309 = vsel %vm781, %v1236, 0
        %v1312 = vsel %vm781, %v1237, 0
        %v1315 = vsel %vm781, %v1238, 0
        %v1318 = vsel %vm781, %v1239, 0
        %v1321 = vsel %vm781, %v1240, 0
        %v1324 = vsel %vm781, %v1241, 0
        %v1327 = vsel %vm781, %v1242, 0
        %v1330 = vsel %vm781, %v1243, 0
        %v1333 = vsel %vm781, %v1244, 0
        %v1336 = vsel %vm781, %v1245, 0
        %v1339 = vsel %vm781, %v1246, 0
        %v1342 = vsel %vm781, %v1247, 0
        %1344 = vmatprep.subr.mxu0 0.0
        %1345 = vmatpush1.msra.mxu0 %v743
        %1346 = vmatprep.subr.mxu0 0.0
        %1347 = vmatpush1.msra.mxu0 %v744
        %1348 = vmatprep.subr.mxu0 0.0
        %1349 = vmatpush1.msra.mxu0 %v745
        %1350 = vmatprep.subr.mxu0 0.0
        %1351 = vmatpush1.msra.mxu0 %v880
        %1352 = vmatprep.subr.mxu0 0.0
        %1353 = vmatpush1.msra.mxu0 0.0
        %1354 = vmatprep.subr.mxu0 0.0
        %1355 = vmatpush1.msra.mxu0 0.0
        %1356 = vmatprep.subr.mxu0 0.0
        %1357 = vmatpush1.msra.mxu0 0.0
        %1358 = vmatprep.subr.mxu0 0.0
        %1359 = vmatpush1.msra.mxu0 0.0
        %1360 = vmatprep.subr.mxu0 0.0
        %1361 = vmatpush1.msra.mxu0 0.0
        %1362 = vmatprep.subr.mxu0 0.0
        %1363 = vmatpush1.msra.mxu0 0.0
        %1364 = vmatprep.subr.mxu0 0.0
        %1365 = vmatpush1.msra.mxu0 0.0
        %1366 = vmatprep.subr.mxu0 0.0
        %1367 = vmatpush1.msra.mxu0 0.0
        %1368 = vmatprep.subr.mxu0 0.0
        %1369 = vmatpush1.msra.mxu0 0.0
        %1370 = vmatprep.subr.mxu0 0.0
        %1371 = vmatpush1.msra.mxu0 0.0
        %1372 = vmatprep.subr.mxu0 0.0
        %1373 = vmatpush1.msra.mxu0 0.0
        %1374 = vmatprep.subr.mxu0 0.0
        %1375 = vmatpush1.msra.mxu0 0.0
        %1376 = vmatprep.subr.mxu0 0.0
        %1377 = vmatpush1.msra.mxu0 0.0
        %1378 = vmatprep.subr.mxu0 0.0
        %1379 = vmatpush1.msra.mxu0 0.0
        %1380 = vmatprep.subr.mxu0 0.0
        %1381 = vmatpush1.msra.mxu0 0.0
        %1382 = vmatprep.subr.mxu0 0.0
        %1383 = vmatpush1.msra.mxu0 0.0
        %1384 = vmatprep.subr.mxu0 0.0
        %1385 = vmatpush1.msra.mxu0 0.0
        %1386 = vmatprep.subr.mxu0 0.0
        %1387 = vmatpush1.msra.mxu0 0.0
        %1388 = vmatprep.subr.mxu0 0.0
        %1389 = vmatpush1.msra.mxu0 0.0
        %1390 = vmatprep.subr.mxu0 0.0
        %1391 = vmatpush1.msra.mxu0 0.0
        %1392 = vmatprep.subr.mxu0 0.0
        %1393 = vmatpush1.msra.mxu0 0.0
        %1394 = vmatprep.subr.mxu0 0.0
        %1395 = vmatpush1.msra.mxu0 0.0
        %1396 = vmatprep.subr.mxu0 0.0
        %1397 = vmatpush1.msra.mxu0 0.0
        %1398 = vmatprep.subr.mxu0 0.0
        %1399 = vmatpush1.msra.mxu0 0.0
        %1400 = vmatprep.subr.mxu0 0.0
        %1401 = vmatpush1.msra.mxu0 0.0
        %1402 = vmatprep.subr.mxu0 0.0
        %1403 = vmatpush1.msra.mxu0 0.0
        %1404 = vmatprep.subr.mxu0 0.0
        %1405 = vmatpush1.msra.mxu0 0.0
        %1406 = vmatprep.subr.mxu0 0.0
        %1407 = vmatpush1.msra.mxu0 0.0
        %1408 = vmatprep.mubr.f32.mxu0 0.0
        %1409 = vmatmul.mubr.f32.gmra.mrb[0].mxu0 %v1249
        %v1410 = vpop.f32.mrb[0].mxu0
        %v1411 = vadd.f32 0.0, %v1410
        %v1412 = vpop.f32.mrb[0].mxu0
        %1413 = vmatprep.mubr.f32.mxu0 0.0
        %1414 = vmatmul.mubr.f32.gmra.mrb[0].mxu0 %v1252
        %v1415 = vpop.f32.mrb[0].mxu0
        %v1416 = vadd.f32 0.0, %v1415
        %v1417 = vpop.f32.mrb[0].mxu0
        %1418 = vmatprep.mubr.f32.mxu0 0.0
        %1419 = vmatmul.mubr.f32.gmra.mrb[0].mxu0 %v1255
        %v1420 = vpop.f32.mrb[0].mxu0
        %v1421 = vadd.f32 0.0, %v1420
        %v1422 = vpop.f32.mrb[0].mxu0
        %1423 = vmatprep.mubr.f32.mxu0 0.0
        %1424 = vmatmul.mubr.f32.gmra.mrb[0].mxu0 %v1258
        %v1425 = vpop.f32.mrb[0].mxu0
        %v1426 = vadd.f32 0.0, %v1425
        %v1427 = vpop.f32.mrb[0].mxu0
        %1428 = vmatprep.mubr.f32.mxu0 0.0
        %1429 = vmatmul.mubr.f32.gmra.mrb[0].mxu0 %v1261
        %v1430 = vpop.f32.mrb[0].mxu0
        %v1431 = vadd.f32 0.0, %v1430
        %v1432 = vpop.f32.mrb[0].mxu0
        %1433 = vmatprep.mubr.f32.mxu0 0.0
        %1434 = vmatmul.mubr.f32.gmra.mrb[0].mxu0 %v1264
        %v1435 = vpop.f32.mrb[0].mxu0
        %v1436 = vadd.f32 0.0, %v1435
        %v1437 = vpop.f32.mrb[0].mxu0
        %1438 = vmatprep.mubr.f32.mxu0 0.0
        %1439 = vmatmul.mubr.f32.gmra.mrb[0].mxu0 %v1267
        %v1440 = vpop.f32.mrb[0].mxu0
        %v1441 = vadd.f32 0.0, %v1440
        %v1442 = vpop.f32.mrb[0].mxu0
        %1443 = vmatprep.mubr.f32.mxu0 0.0
        %1444 = vmatmul.mubr.f32.gmra.mrb[0].mxu0 %v1270
        %v1445 = vpop.f32.mrb[0].mxu0
        %v1446 = vadd.f32 0.0, %v1445
        %v1447 = vpop.f32.mrb[0].mxu0
        %1448 = vmatprep.mubr.f32.mxu0 0.0
        %1449 = vmatmul.mubr.f32.gmra.mrb[0].mxu0 %v1273
        %v1450 = vpop.f32.mrb[0].mxu0
        %v1451 = vadd.f32 0.0, %v1450
        %v1452 = vpop.f32.mrb[0].mxu0
        %1453 = vmatprep.mubr.f32.mxu0 0.0
        %1454 = vmatmul.mubr.f32.gmra.mrb[0].mxu0 %v1276
        %v1455 = vpop.f32.mrb[0].mxu0
        %v1456 = vadd.f32 0.0, %v1455
        %v1457 = vpop.f32.mrb[0].mxu0
        %1458 = vmatprep.mubr.f32.mxu0 0.0
        %1459 = vmatmul.mubr.f32.gmra.mrb[0].mxu0 %v1279
        %v1460 = vpop.f32.mrb[0].mxu0
        %v1461 = vadd.f32 0.0, %v1460
        %v1462 = vpop.f32.mrb[0].mxu0
        %1463 = vmatprep.mubr.f32.mxu0 0.0
        %1464 = vmatmul.mubr.f32.gmra.mrb[0].mxu0 %v1282
        %v1465 = vpop.f32.mrb[0].mxu0
        %v1466 = vadd.f32 0.0, %v1465
        %v1467 = vpop.f32.mrb[0].mxu0
        %1468 = vmatprep.mubr.f32.mxu0 0.0
        %1469 = vmatmul.mubr.f32.gmra.mrb[0].mxu0 %v1285
        %v1470 = vpop.f32.mrb[0].mxu0
        %v1471 = vadd.f32 0.0, %v1470
        %v1472 = vpop.f32.mrb[0].mxu0
        %1473 = vmatprep.mubr.f32.mxu0 0.0
        %1474 = vmatmul.mubr.f32.gmra.mrb[0].mxu0 %v1288
        %v1475 = vpop.f32.mrb[0].mxu0
        %v1476 = vadd.f32 0.0, %v1475
        %v1477 = vpop.f32.mrb[0].mxu0
        %1478 = vmatprep.mubr.f32.mxu0 0.0
        %1479 = vmatmul.mubr.f32.gmra.mrb[0].mxu0 %v1291
        %v1480 = vpop.f32.mrb[0].mxu0
        %v1481 = vadd.f32 0.0, %v1480
        %v1482 = vpop.f32.mrb[0].mxu0
        %1483 = vmatprep.mubr.f32.mxu0 0.0
        %1484 = vmatmul.mubr.f32.gmra.mrb[0].mxu0 %v1294
        %v1485 = vpop.f32.mrb[0].mxu0
        %v1486 = vadd.f32 0.0, %v1485
        %v1487 = vpop.f32.mrb[0].mxu0
        %1488 = vmatprep.mubr.f32.mxu0 0.0
        %1489 = vmatmul.mubr.f32.gmra.mrb[0].mxu0 %v1297
        %v1490 = vpop.f32.mrb[0].mxu0
        %v1491 = vadd.f32 0.0, %v1490
        %v1492 = vpop.f32.mrb[0].mxu0
        %1493 = vmatprep.mubr.f32.mxu0 0.0
        %1494 = vmatmul.mubr.f32.gmra.mrb[0].mxu0 %v1300
        %v1495 = vpop.f32.mrb[0].mxu0
        %v1496 = vadd.f32 0.0, %v1495
        %v1497 = vpop.f32.mrb[0].mxu0
        %1498 = vmatprep.mubr.f32.mxu0 0.0
        %1499 = vmatmul.mubr.f32.gmra.mrb[0].mxu0 %v1303
        %v1500 = vpop.f32.mrb[0].mxu0
        %v1501 = vadd.f32 0.0, %v1500
        %v1502 = vpop.f32.mrb[0].mxu0
        %1503 = vmatprep.mubr.f32.mxu0 0.0
        %1504 = vmatmul.mubr.f32.gmra.mrb[0].mxu0 %v1306
        %v1505 = vpop.f32.mrb[0].mxu0
        %v1506 = vadd.f32 0.0, %v1505
        %v1507 = vpop.f32.mrb[0].mxu0
        %1508 = vmatprep.mubr.f32.mxu0 0.0
        %1509 = vmatmul.mubr.f32.gmra.mrb[0].mxu0 %v1309
        %v1510 = vpop.f32.mrb[0].mxu0
        %v1511 = vadd.f32 0.0, %v1510
        %v1512 = vpop.f32.mrb[0].mxu0
        %1513 = vmatprep.mubr.f32.mxu0 0.0
        %1514 = vmatmul.mubr.f32.gmra.mrb[0].mxu0 %v1312
        %v1515 = vpop.f32.mrb[0].mxu0
        %v1516 = vadd.f32 0.0, %v1515
        %v1517 = vpop.f32.mrb[0].mxu0
        %1518 = vmatprep.mubr.f32.mxu0 0.0
        %1519 = vmatmul.mubr.f32.gmra.mrb[0].mxu0 %v1315
        %v1520 = vpop.f32.mrb[0].mxu0
        %v1521 = vadd.f32 0.0, %v1520
        %v1522 = vpop.f32.mrb[0].mxu0
        %1523 = vmatprep.mubr.f32.mxu0 0.0
        %1524 = vmatmul.mubr.f32.gmra.mrb[0].mxu0 %v1318
        %v1525 = vpop.f32.mrb[0].mxu0
        %v1526 = vadd.f32 0.0, %v1525
        %v1527 = vpop.f32.mrb[0].mxu0
        %1528 = vmatprep.mubr.f32.mxu0 0.0
        %1529 = vmatmul.mubr.f32.gmra.mrb[0].mxu0 %v1321
        %v1530 = vpop.f32.mrb[0].mxu0
        %v1531 = vadd.f32 0.0, %v1530
        %v1532 = vpop.f32.mrb[0].mxu0
        %1533 = vmatprep.mubr.f32.mxu0 0.0
        %1534 = vmatmul.mubr.f32.gmra.mrb[0].mxu0 %v1324
        %v1535 = vpop.f32.mrb[0].mxu0
        %v1536 = vadd.f32 0.0, %v1535
        %v1537 = vpop.f32.mrb[0].mxu0
        %1538 = vmatprep.mubr.f32.mxu0 0.0
        %1539 = vmatmul.mubr.f32.gmra.mrb[0].mxu0 %v1327
        %v1540 = vpop.f32.mrb[0].mxu0
        %v1541 = vadd.f32 0.0, %v1540
        %v1542 = vpop.f32.mrb[0].mxu0
        %1543 = vmatprep.mubr.f32.mxu0 0.0
        %1544 = vmatmul.mubr.f32.gmra.mrb[0].mxu0 %v1330
        %v1545 = vpop.f32.mrb[0].mxu0
        %v1546 = vadd.f32 0.0, %v1545
        %v1547 = vpop.f32.mrb[0].mxu0
        %1548 = vmatprep.mubr.f32.mxu0 0.0
        %1549 = vmatmul.mubr.f32.gmra.mrb[0].mxu0 %v1333
        %v1550 = vpop.f32.mrb[0].mxu0
        %v1551 = vadd.f32 0.0, %v1550
        %v1552 = vpop.f32.mrb[0].mxu0
        %1553 = vmatprep.mubr.f32.mxu0 0.0
        %1554 = vmatmul.mubr.f32.gmra.mrb[0].mxu0 %v1336
        %v1555 = vpop.f32.mrb[0].mxu0
        %v1556 = vadd.f32 0.0, %v1555
        %v1557 = vpop.f32.mrb[0].mxu0
        %1558 = vmatprep.mubr.f32.mxu0 0.0
        %1559 = vmatmul.mubr.f32.gmra.mrb[0].mxu0 %v1339
        %v1560 = vpop.f32.mrb[0].mxu0
        %v1561 = vadd.f32 0.0, %v1560
        %v1562 = vpop.f32.mrb[0].mxu0
        %1563 = vmatprep.mubr.f32.mxu0 0.0
        %1564 = vmatmul.mubr.f32.gmra.mrb[0].mxu0 %v1342
        %v1565 = vpop.f32.mrb[0].mxu0
        %v1566 = vadd.f32 0.0, %v1565
        %v1567 = vpop.f32.mrb[0].mxu0
        %1568 = vdwg.mxu0
        %v1569 = vmul.f32 %v1411, %v1111
        %v1570 = vmul.f32 %v1416, %v1111
        %v1571 = vmul.f32 %v1421, %v1111
        %v1572 = vmul.f32 %v1426, %v1111
        %v1573 = vmul.f32 %v1431, %v1111
        %v1574 = vmul.f32 %v1436, %v1111
        %v1575 = vmul.f32 %v1441, %v1111
        %v1576 = vmul.f32 %v1446, %v1111
        %v1577 = vmul.f32 %v1451, %v1111
        %v1578 = vmul.f32 %v1456, %v1111
        %v1579 = vmul.f32 %v1461, %v1111
        %v1580 = vmul.f32 %v1466, %v1111
        %v1581 = vmul.f32 %v1471, %v1111
        %v1582 = vmul.f32 %v1476, %v1111
        %v1583 = vmul.f32 %v1481, %v1111
        %v1584 = vmul.f32 %v1486, %v1111
        %v1585 = vmul.f32 %v1491, %v1111
        %v1586 = vmul.f32 %v1496, %v1111
        %v1587 = vmul.f32 %v1501, %v1111
        %v1588 = vmul.f32 %v1506, %v1111
        %v1589 = vmul.f32 %v1511, %v1111
        %v1590 = vmul.f32 %v1516, %v1111
        %v1591 = vmul.f32 %v1521, %v1111
        %v1592 = vmul.f32 %v1526, %v1111
        %v1593 = vmul.f32 %v1531, %v1111
        %v1594 = vmul.f32 %v1536, %v1111
        %v1595 = vmul.f32 %v1541, %v1111
        %v1596 = vmul.f32 %v1546, %v1111
        %v1597 = vmul.f32 %v1551, %v1111
        %v1598 = vmul.f32 %v1556, %v1111
        %v1599 = vmul.f32 %v1561, %v1111
        %v1600 = vmul.f32 %v1566, %v1111
        %v1601 = vadd.f32 %v1569, %v1149
        %v1602 = vadd.f32 %v1570, %v1149
        %v1603 = vadd.f32 %v1571, %v1149
        %v1604 = vadd.f32 %v1572, %v1149
        %v1605 = vadd.f32 %v1573, %v1149
        %v1606 = vadd.f32 %v1574, %v1149
        %v1607 = vadd.f32 %v1575, %v1149
        %v1608 = vadd.f32 %v1576, %v1149
        %v1609 = vadd.f32 %v1577, %v1149
        %v1610 = vadd.f32 %v1578, %v1149
        %v1611 = vadd.f32 %v1579, %v1149
        %v1612 = vadd.f32 %v1580, %v1149
        %v1613 = vadd.f32 %v1581, %v1149
        %v1614 = vadd.f32 %v1582, %v1149
        %v1615 = vadd.f32 %v1583, %v1149
        %v1616 = vadd.f32 %v1584, %v1149
        %v1617 = vadd.f32 %v1585, %v1149
        %v1618 = vadd.f32 %v1586, %v1149
        %v1619 = vadd.f32 %v1587, %v1149
        %v1620 = vadd.f32 %v1588, %v1149
        %v1621 = vadd.f32 %v1589, %v1149
        %v1622 = vadd.f32 %v1590, %v1149
        %v1623 = vadd.f32 %v1591, %v1149
        %v1624 = vadd.f32 %v1592, %v1149
        %v1625 = vadd.f32 %v1593, %v1149
        %v1626 = vadd.f32 %v1594, %v1149
        %v1627 = vadd.f32 %v1595, %v1149
        %v1628 = vadd.f32 %v1596, %v1149
        %v1629 = vadd.f32 %v1597, %v1149
        %v1630 = vadd.f32 %v1598, %v1149
        %v1631 = vadd.f32 %v1599, %v1149
        %v1632 = vadd.f32 %v1600, %v1149
        %v1633 = vmax.f32 %v1601, 0.0
        %v1634 = vmax.f32 %v1602, 0.0
        %v1635 = vmax.f32 %v1603, 0.0
        %v1636 = vmax.f32 %v1604, 0.0
        %v1637 = vmax.f32 %v1605, 0.0
        %v1638 = vmax.f32 %v1606, 0.0
        %v1639 = vmax.f32 %v1607, 0.0
        %v1640 = vmax.f32 %v1608, 0.0
        %v1641 = vmax.f32 %v1609, 0.0
        %v1642 = vmax.f32 %v1610, 0.0
        %v1643 = vmax.f32 %v1611, 0.0
        %v1644 = vmax.f32 %v1612, 0.0
        %v1645 = vmax.f32 %v1613, 0.0
        %v1646 = vmax.f32 %v1614, 0.0
        %v1647 = vmax.f32 %v1615, 0.0
        %v1648 = vmax.f32 %v1616, 0.0
        %v1649 = vmax.f32 %v1617, 0.0
        %v1650 = vmax.f32 %v1618, 0.0
        %v1651 = vmax.f32 %v1619, 0.0
        %v1652 = vmax.f32 %v1620, 0.0
        %v1653 = vmax.f32 %v1621, 0.0
        %v1654 = vmax.f32 %v1622, 0.0
        %v1655 = vmax.f32 %v1623, 0.0
        %v1656 = vmax.f32 %v1624, 0.0
        %v1657 = vmax.f32 %v1625, 0.0
        %v1658 = vmax.f32 %v1626, 0.0
        %v1659 = vmax.f32 %v1627, 0.0
        %v1660 = vmax.f32 %v1628, 0.0
        %v1661 = vmax.f32 %v1629, 0.0
        %v1662 = vmax.f32 %v1630, 0.0
        %v1663 = vmax.f32 %v1631, 0.0
        %v1664 = vmax.f32 %v1632, 0.0
        %v1665 = vmax.f32 %v1183, %v1633
        %v1666 = vmax.f32 %v1184, %v1634
        %v1667 = vmax.f32 %v1185, %v1635
        %v1668 = vmax.f32 %v1186, %v1636
        %v1669 = vmax.f32 %v1187, %v1637
        %v1670 = vmax.f32 %v1188, %v1638
        %v1671 = vmax.f32 %v1189, %v1639
        %v1672 = vmax.f32 %v1190, %v1640
        %v1673 = vmax.f32 %v1191, %v1641
        %v1674 = vmax.f32 %v1192, %v1642
        %v1675 = vmax.f32 %v1193, %v1643
        %v1676 = vmax.f32 %v1194, %v1644
        %v1677 = vmax.f32 %v1195, %v1645
        %v1678 = vmax.f32 %v1196, %v1646
        %v1679 = vmax.f32 %v1197, %v1647
        %v1680 = vmax.f32 %v1198, %v1648
        %v1681 = vmax.f32 %v1199, %v1649
        %v1682 = vmax.f32 %v1200, %v1650
        %v1683 = vmax.f32 %v1201, %v1651
        %v1684 = vmax.f32 %v1202, %v1652
        %v1685 = vmax.f32 %v1203, %v1653
        %v1686 = vmax.f32 %v1204, %v1654
        %v1687 = vmax.f32 %v1205, %v1655
        %v1688 = vmax.f32 %v1206, %v1656
        %v1689 = vmax.f32 %v1207, %v1657
        %v1690 = vmax.f32 %v1208, %v1658
        %v1691 = vmax.f32 %v1209, %v1659
        %v1692 = vmax.f32 %v1210, %v1660
        %v1693 = vmax.f32 %v1211, %v1661
        %v1694 = vmax.f32 %v1212, %v1662
        %v1695 = vmax.f32 %v1213, %v1663
        %v1696 = vmax.f32 %v1214, %v1664
        %s1697 = scalar_lea.vmem %s713, 512 [#allocation2]
        %v1698 = vld [vmem:[%s1697] sm:$0xff]
        %v1699 = vld [vmem:[%s1697 + $0x8] sm:$0xff]
        %v1700 = vld [vmem:[%s1697 + $0x10] sm:$0xff]
        %v1701 = vld [vmem:[%s1697 + $0x18] sm:$0xff]
        %v1702 = vld [vmem:[%s1697 + $0x20] sm:$0xff]
        %v1703 = vld [vmem:[%s1697 + $0x28] sm:$0xff]
        %v1704 = vld [vmem:[%s1697 + $0x30] sm:$0xff]
        %v1705 = vld [vmem:[%s1697 + $0x38] sm:$0xff]
        %v1706 = vld [vmem:[%s1697 + $0x40] sm:$0xff]
        %v1707 = vld [vmem:[%s1697 + $0x48] sm:$0xff]
        %v1708 = vld [vmem:[%s1697 + $0x50] sm:$0xff]
        %v1709 = vld [vmem:[%s1697 + $0x58] sm:$0xff]
        %v1710 = vld [vmem:[%s1697 + $0x60] sm:$0xff]
        %v1711 = vld [vmem:[%s1697 + $0x68] sm:$0xff]
        %v1712 = vld [vmem:[%s1697 + $0x70] sm:$0xff]
        %v1713 = vld [vmem:[%s1697 + $0x78] sm:$0xff]
        %v1714 = vld [vmem:[%s1697 + $0x80] sm:$0xff]
        %v1715 = vld [vmem:[%s1697 + $0x88] sm:$0xff]
        %v1716 = vld [vmem:[%s1697 + $0x90] sm:$0xff]
        %v1717 = vld [vmem:[%s1697 + $0x98] sm:$0xff]
        %v1718 = vld [vmem:[%s1697 + $0xa0] sm:$0xff]
        %v1719 = vld [vmem:[%s1697 + $0xa8] sm:$0xff]
        %v1720 = vld [vmem:[%s1697 + $0xb0] sm:$0xff]
        %v1721 = vld [vmem:[%s1697 + $0xb8] sm:$0xff]
        %v1722 = vld [vmem:[%s1697 + $0xc0] sm:$0xff]
        %v1723 = vld [vmem:[%s1697 + $0xc8] sm:$0xff]
        %v1724 = vld [vmem:[%s1697 + $0xd0] sm:$0xff]
        %v1725 = vld [vmem:[%s1697 + $0xd8] sm:$0xff]
        %v1726 = vld [vmem:[%s1697 + $0xe0] sm:$0xff]
        %v1727 = vld [vmem:[%s1697 + $0xe8] sm:$0xff]
        %v1728 = vld [vmem:[%s1697 + $0xf0] sm:$0xff]
        %v1729 = vld [vmem:[%s1697 + $0xf8] sm:$0xff]
        %v1731 = vsel %vm781, %v1698, 0
        %v1734 = vsel %vm781, %v1699, 0
        %v1737 = vsel %vm781, %v1700, 0
        %v1740 = vsel %vm781, %v1701, 0
        %v1743 = vsel %vm781, %v1702, 0
        %v1746 = vsel %vm781, %v1703, 0
        %v1749 = vsel %vm781, %v1704, 0
        %v1752 = vsel %vm781, %v1705, 0
        %v1755 = vsel %vm781, %v1706, 0
        %v1758 = vsel %vm781, %v1707, 0
        %v1761 = vsel %vm781, %v1708, 0
        %v1764 = vsel %vm781, %v1709, 0
        %v1767 = vsel %vm781, %v1710, 0
        %v1770 = vsel %vm781, %v1711, 0
        %v1773 = vsel %vm781, %v1712, 0
        %v1776 = vsel %vm781, %v1713, 0
        %v1779 = vsel %vm781, %v1714, 0
        %v1782 = vsel %vm781, %v1715, 0
        %v1785 = vsel %vm781, %v1716, 0
        %v1788 = vsel %vm781, %v1717, 0
        %v1791 = vsel %vm781, %v1718, 0
        %v1794 = vsel %vm781, %v1719, 0
        %v1797 = vsel %vm781, %v1720, 0
        %v1800 = vsel %vm781, %v1721, 0
        %v1803 = vsel %vm781, %v1722, 0
        %v1806 = vsel %vm781, %v1723, 0
        %v1809 = vsel %vm781, %v1724, 0
        %v1812 = vsel %vm781, %v1725, 0
        %v1815 = vsel %vm781, %v1726, 0
        %v1818 = vsel %vm781, %v1727, 0
        %v1821 = vsel %vm781, %v1728, 0
        %v1824 = vsel %vm781, %v1729, 0
        %1826 = vmatprep.subr.mxu0 0.0
        %1827 = vmatpush1.msra.mxu0 %v743
        %1828 = vmatprep.subr.mxu0 0.0
        %1829 = vmatpush1.msra.mxu0 %v744
        %1830 = vmatprep.subr.mxu0 0.0
        %1831 = vmatpush1.msra.mxu0 %v745
        %1832 = vmatprep.subr.mxu0 0.0
        %1833 = vmatpush1.msra.mxu0 %v880
        %1834 = vmatprep.subr.mxu0 0.0
        %1835 = vmatpush1.msra.mxu0 0.0
        %1836 = vmatprep.subr.mxu0 0.0
        %1837 = vmatpush1.msra.mxu0 0.0
        %1838 = vmatprep.subr.mxu0 0.0
        %1839 = vmatpush1.msra.mxu0 0.0
        %1840 = vmatprep.subr.mxu0 0.0
        %1841 = vmatpush1.msra.mxu0 0.0
        %1842 = vmatprep.subr.mxu0 0.0
        %1843 = vmatpush1.msra.mxu0 0.0
        %1844 = vmatprep.subr.mxu0 0.0
        %1845 = vmatpush1.msra.mxu0 0.0
        %1846 = vmatprep.subr.mxu0 0.0
        %1847 = vmatpush1.msra.mxu0 0.0
        %1848 = vmatprep.subr.mxu0 0.0
        %1849 = vmatpush1.msra.mxu0 0.0
        %1850 = vmatprep.subr.mxu0 0.0
        %1851 = vmatpush1.msra.mxu0 0.0
        %1852 = vmatprep.subr.mxu0 0.0
        %1853 = vmatpush1.msra.mxu0 0.0
        %1854 = vmatprep.subr.mxu0 0.0
        %1855 = vmatpush1.msra.mxu0 0.0
        %1856 = vmatprep.subr.mxu0 0.0
        %1857 = vmatpush1.msra.mxu0 0.0
        %1858 = vmatprep.subr.mxu0 0.0
        %1859 = vmatpush1.msra.mxu0 0.0
        %1860 = vmatprep.subr.mxu0 0.0
        %1861 = vmatpush1.msra.mxu0 0.0
        %1862 = vmatprep.subr.mxu0 0.0
        %1863 = vmatpush1.msra.mxu0 0.0
        %1864 = vmatprep.subr.mxu0 0.0
        %1865 = vmatpush1.msra.mxu0 0.0
        %1866 = vmatprep.subr.mxu0 0.0
        %1867 = vmatpush1.msra.mxu0 0.0
        %1868 = vmatprep.subr.mxu0 0.0
        %1869 = vmatpush1.msra.mxu0 0.0
        %1870 = vmatprep.subr.mxu0 0.0
        %1871 = vmatpush1.msra.mxu0 0.0
        %1872 = vmatprep.subr.mxu0 0.0
        %1873 = vmatpush1.msra.mxu0 0.0
        %1874 = vmatprep.subr.mxu0 0.0
        %1875 = vmatpush1.msra.mxu0 0.0
        %1876 = vmatprep.subr.mxu0 0.0
        %1877 = vmatpush1.msra.mxu0 0.0
        %1878 = vmatprep.subr.mxu0 0.0
        %1879 = vmatpush1.msra.mxu0 0.0
        %1880 = vmatprep.subr.mxu0 0.0
        %1881 = vmatpush1.msra.mxu0 0.0
        %1882 = vmatprep.subr.mxu0 0.0
        %1883 = vmatpush1.msra.mxu0 0.0
        %1884 = vmatprep.subr.mxu0 0.0
        %1885 = vmatpush1.msra.mxu0 0.0
        %1886 = vmatprep.subr.mxu0 0.0
        %1887 = vmatpush1.msra.mxu0 0.0
        %1888 = vmatprep.subr.mxu0 0.0
        %1889 = vmatpush1.msra.mxu0 0.0
        %1890 = vmatprep.mubr.f32.mxu0 0.0
        %1891 = vmatmul.mubr.f32.gmra.mrb[0].mxu0 %v1731
        %v1892 = vpop.f32.mrb[0].mxu0
        %v1893 = vadd.f32 0.0, %v1892
        %v1894 = vpop.f32.mrb[0].mxu0
        %1895 = vmatprep.mubr.f32.mxu0 0.0
        %1896 = vmatmul.mubr.f32.gmra.mrb[0].mxu0 %v1734
        %v1897 = vpop.f32.mrb[0].mxu0
        %v1898 = vadd.f32 0.0, %v1897
        %v1899 = vpop.f32.mrb[0].mxu0
        %1900 = vmatprep.mubr.f32.mxu0 0.0
        %1901 = vmatmul.mubr.f32.gmra.mrb[0].mxu0 %v1737
        %v1902 = vpop.f32.mrb[0].mxu0
        %v1903 = vadd.f32 0.0, %v1902
        %v1904 = vpop.f32.mrb[0].mxu0
        %1905 = vmatprep.mubr.f32.mxu0 0.0
        %1906 = vmatmul.mubr.f32.gmra.mrb[0].mxu0 %v1740
        %v1907 = vpop.f32.mrb[0].mxu0
        %v1908 = vadd.f32 0.0, %v1907
        %v1909 = vpop.f32.mrb[0].mxu0
        %1910 = vmatprep.mubr.f32.mxu0 0.0
        %1911 = vmatmul.mubr.f32.gmra.mrb[0].mxu0 %v1743
        %v1912 = vpop.f32.mrb[0].mxu0
        %v1913 = vadd.f32 0.0, %v1912
        %v1914 = vpop.f32.mrb[0].mxu0
        %1915 = vmatprep.mubr.f32.mxu0 0.0
        %1916 = vmatmul.mubr.f32.gmra.mrb[0].mxu0 %v1746
        %v1917 = vpop.f32.mrb[0].mxu0
        %v1918 = vadd.f32 0.0, %v1917
        %v1919 = vpop.f32.mrb[0].mxu0
        %1920 = vmatprep.mubr.f32.mxu0 0.0
        %1921 = vmatmul.mubr.f32.gmra.mrb[0].mxu0 %v1749
        %v1922 = vpop.f32.mrb[0].mxu0
        %v1923 = vadd.f32 0.0, %v1922
        %v1924 = vpop.f32.mrb[0].mxu0
        %1925 = vmatprep.mubr.f32.mxu0 0.0
        %1926 = vmatmul.mubr.f32.gmra.mrb[0].mxu0 %v1752
        %v1927 = vpop.f32.mrb[0].mxu0
        %v1928 = vadd.f32 0.0, %v1927
        %v1929 = vpop.f32.mrb[0].mxu0
        %1930 = vmatprep.mubr.f32.mxu0 0.0
        %1931 = vmatmul.mubr.f32.gmra.mrb[0].mxu0 %v1755
        %v1932 = vpop.f32.mrb[0].mxu0
        %v1933 = vadd.f32 0.0, %v1932
        %v1934 = vpop.f32.mrb[0].mxu0
        %1935 = vmatprep.mubr.f32.mxu0 0.0
        %1936 = vmatmul.mubr.f32.gmra.mrb[0].mxu0 %v1758
        %v1937 = vpop.f32.mrb[0].mxu0
        %v1938 = vadd.f32 0.0, %v1937
        %v1939 = vpop.f32.mrb[0].mxu0
        %1940 = vmatprep.mubr.f32.mxu0 0.0
        %1941 = vmatmul.mubr.f32.gmra.mrb[0].mxu0 %v1761
        %v1942 = vpop.f32.mrb[0].mxu0
        %v1943 = vadd.f32 0.0, %v1942
        %v1944 = vpop.f32.mrb[0].mxu0
        %1945 = vmatprep.mubr.f32.mxu0 0.0
        %1946 = vmatmul.mubr.f32.gmra.mrb[0].mxu0 %v1764
        %v1947 = vpop.f32.mrb[0].mxu0
        %v1948 = vadd.f32 0.0, %v1947
        %v1949 = vpop.f32.mrb[0].mxu0
        %1950 = vmatprep.mubr.f32.mxu0 0.0
        %1951 = vmatmul.mubr.f32.gmra.mrb[0].mxu0 %v1767
        %v1952 = vpop.f32.mrb[0].mxu0
        %v1953 = vadd.f32 0.0, %v1952
        %v1954 = vpop.f32.mrb[0].mxu0
        %1955 = vmatprep.mubr.f32.mxu0 0.0
        %1956 = vmatmul.mubr.f32.gmra.mrb[0].mxu0 %v1770
        %v1957 = vpop.f32.mrb[0].mxu0
        %v1958 = vadd.f32 0.0, %v1957
        %v1959 = vpop.f32.mrb[0].mxu0
        %1960 = vmatprep.mubr.f32.mxu0 0.0
        %1961 = vmatmul.mubr.f32.gmra.mrb[0].mxu0 %v1773
        %v1962 = vpop.f32.mrb[0].mxu0
        %v1963 = vadd.f32 0.0, %v1962
        %v1964 = vpop.f32.mrb[0].mxu0
        %1965 = vmatprep.mubr.f32.mxu0 0.0
        %1966 = vmatmul.mubr.f32.gmra.mrb[0].mxu0 %v1776
        %v1967 = vpop.f32.mrb[0].mxu0
        %v1968 = vadd.f32 0.0, %v1967
        %v1969 = vpop.f32.mrb[0].mxu0
        %1970 = vmatprep.mubr.f32.mxu0 0.0
        %1971 = vmatmul.mubr.f32.gmra.mrb[0].mxu0 %v1779
        %v1972 = vpop.f32.mrb[0].mxu0
        %v1973 = vadd.f32 0.0, %v1972
        %v1974 = vpop.f32.mrb[0].mxu0
        %1975 = vmatprep.mubr.f32.mxu0 0.0
        %1976 = vmatmul.mubr.f32.gmra.mrb[0].mxu0 %v1782
        %v1977 = vpop.f32.mrb[0].mxu0
        %v1978 = vadd.f32 0.0, %v1977
        %v1979 = vpop.f32.mrb[0].mxu0
        %1980 = vmatprep.mubr.f32.mxu0 0.0
        %1981 = vmatmul.mubr.f32.gmra.mrb[0].mxu0 %v1785
        %v1982 = vpop.f32.mrb[0].mxu0
        %v1983 = vadd.f32 0.0, %v1982
        %v1984 = vpop.f32.mrb[0].mxu0
        %1985 = vmatprep.mubr.f32.mxu0 0.0
        %1986 = vmatmul.mubr.f32.gmra.mrb[0].mxu0 %v1788
        %v1987 = vpop.f32.mrb[0].mxu0
        %v1988 = vadd.f32 0.0, %v1987
        %v1989 = vpop.f32.mrb[0].mxu0
        %1990 = vmatprep.mubr.f32.mxu0 0.0
        %1991 = vmatmul.mubr.f32.gmra.mrb[0].mxu0 %v1791
        %v1992 = vpop.f32.mrb[0].mxu0
        %v1993 = vadd.f32 0.0, %v1992
        %v1994 = vpop.f32.mrb[0].mxu0
        %1995 = vmatprep.mubr.f32.mxu0 0.0
        %1996 = vmatmul.mubr.f32.gmra.mrb[0].mxu0 %v1794
        %v1997 = vpop.f32.mrb[0].mxu0
        %v1998 = vadd.f32 0.0, %v1997
        %v1999 = vpop.f32.mrb[0].mxu0
        %2000 = vmatprep.mubr.f32.mxu0 0.0
        %2001 = vmatmul.mubr.f32.gmra.mrb[0].mxu0 %v1797
        %v2002 = vpop.f32.mrb[0].mxu0
        %v2003 = vadd.f32 0.0, %v2002
        %v2004 = vpop.f32.mrb[0].mxu0
        %2005 = vmatprep.mubr.f32.mxu0 0.0
        %2006 = vmatmul.mubr.f32.gmra.mrb[0].mxu0 %v1800
        %v2007 = vpop.f32.mrb[0].mxu0
        %v2008 = vadd.f32 0.0, %v2007
        %v2009 = vpop.f32.mrb[0].mxu0
        %2010 = vmatprep.mubr.f32.mxu0 0.0
        %2011 = vmatmul.mubr.f32.gmra.mrb[0].mxu0 %v1803
        %v2012 = vpop.f32.mrb[0].mxu0
        %v2013 = vadd.f32 0.0, %v2012
        %v2014 = vpop.f32.mrb[0].mxu0
        %2015 = vmatprep.mubr.f32.mxu0 0.0
        %2016 = vmatmul.mubr.f32.gmra.mrb[0].mxu0 %v1806
        %v2017 = vpop.f32.mrb[0].mxu0
        %v2018 = vadd.f32 0.0, %v2017
        %v2019 = vpop.f32.mrb[0].mxu0
        %2020 = vmatprep.mubr.f32.mxu0 0.0
        %2021 = vmatmul.mubr.f32.gmra.mrb[0].mxu0 %v1809
        %v2022 = vpop.f32.mrb[0].mxu0
        %v2023 = vadd.f32 0.0, %v2022
        %v2024 = vpop.f32.mrb[0].mxu0
        %2025 = vmatprep.mubr.f32.mxu0 0.0
        %2026 = vmatmul.mubr.f32.gmra.mrb[0].mxu0 %v1812
        %v2027 = vpop.f32.mrb[0].mxu0
        %v2028 = vadd.f32 0.0, %v2027
        %v2029 = vpop.f32.mrb[0].mxu0
        %2030 = vmatprep.mubr.f32.mxu0 0.0
        %2031 = vmatmul.mubr.f32.gmra.mrb[0].mxu0 %v1815
        %v2032 = vpop.f32.mrb[0].mxu0
        %v2033 = vadd.f32 0.0, %v2032
        %v2034 = vpop.f32.mrb[0].mxu0
        %2035 = vmatprep.mubr.f32.mxu0 0.0
        %2036 = vmatmul.mubr.f32.gmra.mrb[0].mxu0 %v1818
        %v2037 = vpop.f32.mrb[0].mxu0
        %v2038 = vadd.f32 0.0, %v2037
        %v2039 = vpop.f32.mrb[0].mxu0
        %2040 = vmatprep.mubr.f32.mxu0 0.0
        %2041 = vmatmul.mubr.f32.gmra.mrb[0].mxu0 %v1821
        %v2042 = vpop.f32.mrb[0].mxu0
        %v2043 = vadd.f32 0.0, %v2042
        %v2044 = vpop.f32.mrb[0].mxu0
        %2045 = vmatprep.mubr.f32.mxu0 0.0
        %2046 = vmatmul.mubr.f32.gmra.mrb[0].mxu0 %v1824
        %v2047 = vpop.f32.mrb[0].mxu0
        %v2048 = vadd.f32 0.0, %v2047
        %v2049 = vpop.f32.mrb[0].mxu0
        %2050 = vdwg.mxu0
        %v2051 = vmul.f32 %v1893, %v1111
        %v2052 = vmul.f32 %v1898, %v1111
        %v2053 = vmul.f32 %v1903, %v1111
        %v2054 = vmul.f32 %v1908, %v1111
        %v2055 = vmul.f32 %v1913, %v1111
        %v2056 = vmul.f32 %v1918, %v1111
        %v2057 = vmul.f32 %v1923, %v1111
        %v2058 = vmul.f32 %v1928, %v1111
        %v2059 = vmul.f32 %v1933, %v1111
        %v2060 = vmul.f32 %v1938, %v1111
        %v2061 = vmul.f32 %v1943, %v1111
        %v2062 = vmul.f32 %v1948, %v1111
        %v2063 = vmul.f32 %v1953, %v1111
        %v2064 = vmul.f32 %v1958, %v1111
        %v2065 = vmul.f32 %v1963, %v1111
        %v2066 = vmul.f32 %v1968, %v1111
        %v2067 = vmul.f32 %v1973, %v1111
        %v2068 = vmul.f32 %v1978, %v1111
        %v2069 = vmul.f32 %v1983, %v1111
        %v2070 = vmul.f32 %v1988, %v1111
        %v2071 = vmul.f32 %v1993, %v1111
        %v2072 = vmul.f32 %v1998, %v1111
        %v2073 = vmul.f32 %v2003, %v1111
        %v2074 = vmul.f32 %v2008, %v1111
        %v2075 = vmul.f32 %v2013, %v1111
        %v2076 = vmul.f32 %v2018, %v1111
        %v2077 = vmul.f32 %v2023, %v1111
        %v2078 = vmul.f32 %v2028, %v1111
        %v2079 = vmul.f32 %v2033, %v1111
        %v2080 = vmul.f32 %v2038, %v1111
        %v2081 = vmul.f32 %v2043, %v1111
        %v2082 = vmul.f32 %v2048, %v1111
        %v2083 = vadd.f32 %v2051, %v1149
        %v2084 = vadd.f32 %v2052, %v1149
        %v2085 = vadd.f32 %v2053, %v1149
        %v2086 = vadd.f32 %v2054, %v1149
        %v2087 = vadd.f32 %v2055, %v1149
        %v2088 = vadd.f32 %v2056, %v1149
        %v2089 = vadd.f32 %v2057, %v1149
        %v2090 = vadd.f32 %v2058, %v1149
        %v2091 = vadd.f32 %v2059, %v1149
        %v2092 = vadd.f32 %v2060, %v1149
        %v2093 = vadd.f32 %v2061, %v1149
        %v2094 = vadd.f32 %v2062, %v1149
        %v2095 = vadd.f32 %v2063, %v1149
        %v2096 = vadd.f32 %v2064, %v1149
        %v2097 = vadd.f32 %v2065, %v1149
        %v2098 = vadd.f32 %v2066, %v1149
        %v2099 = vadd.f32 %v2067, %v1149
        %v2100 = vadd.f32 %v2068, %v1149
        %v2101 = vadd.f32 %v2069, %v1149
        %v2102 = vadd.f32 %v2070, %v1149
        %v2103 = vadd.f32 %v2071, %v1149
        %v2104 = vadd.f32 %v2072, %v1149
        %v2105 = vadd.f32 %v2073, %v1149
        %v2106 = vadd.f32 %v2074, %v1149
        %v2107 = vadd.f32 %v2075, %v1149
        %v2108 = vadd.f32 %v2076, %v1149
        %v2109 = vadd.f32 %v2077, %v1149
        %v2110 = vadd.f32 %v2078, %v1149
        %v2111 = vadd.f32 %v2079, %v1149
        %v2112 = vadd.f32 %v2080, %v1149
        %v2113 = vadd.f32 %v2081, %v1149
        %v2114 = vadd.f32 %v2082, %v1149
        %v2115 = vmax.f32 %v2083, 0.0
        %v2116 = vmax.f32 %v2084, 0.0
        %v2117 = vmax.f32 %v2085, 0.0
        %v2118 = vmax.f32 %v2086, 0.0
        %v2119 = vmax.f32 %v2087, 0.0
        %v2120 = vmax.f32 %v2088, 0.0
        %v2121 = vmax.f32 %v2089, 0.0
        %v2122 = vmax.f32 %v2090, 0.0
        %v2123 = vmax.f32 %v2091, 0.0
        %v2124 = vmax.f32 %v2092, 0.0
        %v2125 = vmax.f32 %v2093, 0.0
        %v2126 = vmax.f32 %v2094, 0.0
        %v2127 = vmax.f32 %v2095, 0.0
        %v2128 = vmax.f32 %v2096, 0.0
        %v2129 = vmax.f32 %v2097, 0.0
        %v2130 = vmax.f32 %v2098, 0.0
        %v2131 = vmax.f32 %v2099, 0.0
        %v2132 = vmax.f32 %v2100, 0.0
        %v2133 = vmax.f32 %v2101, 0.0
        %v2134 = vmax.f32 %v2102, 0.0
        %v2135 = vmax.f32 %v2103, 0.0
        %v2136 = vmax.f32 %v2104, 0.0
        %v2137 = vmax.f32 %v2105, 0.0
        %v2138 = vmax.f32 %v2106, 0.0
        %v2139 = vmax.f32 %v2107, 0.0
        %v2140 = vmax.f32 %v2108, 0.0
        %v2141 = vmax.f32 %v2109, 0.0
        %v2142 = vmax.f32 %v2110, 0.0
        %v2143 = vmax.f32 %v2111, 0.0
        %v2144 = vmax.f32 %v2112, 0.0
        %v2145 = vmax.f32 %v2113, 0.0
        %v2146 = vmax.f32 %v2114, 0.0
        %s2147 = scalar_lea.vmem %s713, 768 [#allocation2]
        %v2148 = vld [vmem:[%s2147] sm:$0xff]
        %v2149 = vld [vmem:[%s2147 + $0x8] sm:$0xff]
        %v2150 = vld [vmem:[%s2147 + $0x10] sm:$0xff]
        %v2151 = vld [vmem:[%s2147 + $0x18] sm:$0xff]
        %v2152 = vld [vmem:[%s2147 + $0x20] sm:$0xff]
        %v2153 = vld [vmem:[%s2147 + $0x28] sm:$0xff]
        %v2154 = vld [vmem:[%s2147 + $0x30] sm:$0xff]
        %v2155 = vld [vmem:[%s2147 + $0x38] sm:$0xff]
        %v2156 = vld [vmem:[%s2147 + $0x40] sm:$0xff]
        %v2157 = vld [vmem:[%s2147 + $0x48] sm:$0xff]
        %v2158 = vld [vmem:[%s2147 + $0x50] sm:$0xff]
        %v2159 = vld [vmem:[%s2147 + $0x58] sm:$0xff]
        %v2160 = vld [vmem:[%s2147 + $0x60] sm:$0xff]
        %v2161 = vld [vmem:[%s2147 + $0x68] sm:$0xff]
        %v2162 = vld [vmem:[%s2147 + $0x70] sm:$0xff]
        %v2163 = vld [vmem:[%s2147 + $0x78] sm:$0xff]
        %v2164 = vld [vmem:[%s2147 + $0x80] sm:$0xff]
        %v2165 = vld [vmem:[%s2147 + $0x88] sm:$0xff]
        %v2166 = vld [vmem:[%s2147 + $0x90] sm:$0xff]
        %v2167 = vld [vmem:[%s2147 + $0x98] sm:$0xff]
        %v2168 = vld [vmem:[%s2147 + $0xa0] sm:$0xff]
        %v2169 = vld [vmem:[%s2147 + $0xa8] sm:$0xff]
        %v2170 = vld [vmem:[%s2147 + $0xb0] sm:$0xff]
        %v2171 = vld [vmem:[%s2147 + $0xb8] sm:$0xff]
        %v2172 = vld [vmem:[%s2147 + $0xc0] sm:$0xff]
        %v2173 = vld [vmem:[%s2147 + $0xc8] sm:$0xff]
        %v2174 = vld [vmem:[%s2147 + $0xd0] sm:$0xff]
        %v2175 = vld [vmem:[%s2147 + $0xd8] sm:$0xff]
        %v2176 = vld [vmem:[%s2147 + $0xe0] sm:$0xff]
        %v2177 = vld [vmem:[%s2147 + $0xe8] sm:$0xff]
        %v2178 = vld [vmem:[%s2147 + $0xf0] sm:$0xff]
        %v2179 = vld [vmem:[%s2147 + $0xf8] sm:$0xff]
        %v2181 = vsel %vm781, %v2148, 0
        %v2184 = vsel %vm781, %v2149, 0
        %v2187 = vsel %vm781, %v2150, 0
        %v2190 = vsel %vm781, %v2151, 0
        %v2193 = vsel %vm781, %v2152, 0
        %v2196 = vsel %vm781, %v2153, 0
        %v2199 = vsel %vm781, %v2154, 0
        %v2202 = vsel %vm781, %v2155, 0
        %v2205 = vsel %vm781, %v2156, 0
        %v2208 = vsel %vm781, %v2157, 0
        %v2211 = vsel %vm781, %v2158, 0
        %v2214 = vsel %vm781, %v2159, 0
        %v2217 = vsel %vm781, %v2160, 0
        %v2220 = vsel %vm781, %v2161, 0
        %v2223 = vsel %vm781, %v2162, 0
        %v2226 = vsel %vm781, %v2163, 0
        %v2229 = vsel %vm781, %v2164, 0
        %v2232 = vsel %vm781, %v2165, 0
        %v2235 = vsel %vm781, %v2166, 0
        %v2238 = vsel %vm781, %v2167, 0
        %v2241 = vsel %vm781, %v2168, 0
        %v2244 = vsel %vm781, %v2169, 0
        %v2247 = vsel %vm781, %v2170, 0
        %v2250 = vsel %vm781, %v2171, 0
        %v2253 = vsel %vm781, %v2172, 0
        %v2256 = vsel %vm781, %v2173, 0
        %v2259 = vsel %vm781, %v2174, 0
        %v2262 = vsel %vm781, %v2175, 0
        %v2265 = vsel %vm781, %v2176, 0
        %v2268 = vsel %vm781, %v2177, 0
        %v2271 = vsel %vm781, %v2178, 0
        %v2274 = vsel %vm781, %v2179, 0
        %2276 = vmatprep.subr.mxu0 0.0
        %2277 = vmatpush1.msra.mxu0 %v743
        %2278 = vmatprep.subr.mxu0 0.0
        %2279 = vmatpush1.msra.mxu0 %v744
        %2280 = vmatprep.subr.mxu0 0.0
        %2281 = vmatpush1.msra.mxu0 %v745
        %2282 = vmatprep.subr.mxu0 0.0
        %2283 = vmatpush1.msra.mxu0 %v880
        %2284 = vmatprep.subr.mxu0 0.0
        %2285 = vmatpush1.msra.mxu0 0.0
        %2286 = vmatprep.subr.mxu0 0.0
        %2287 = vmatpush1.msra.mxu0 0.0
        %2288 = vmatprep.subr.mxu0 0.0
        %2289 = vmatpush1.msra.mxu0 0.0
        %2290 = vmatprep.subr.mxu0 0.0
        %2291 = vmatpush1.msra.mxu0 0.0
        %2292 = vmatprep.subr.mxu0 0.0
        %2293 = vmatpush1.msra.mxu0 0.0
        %2294 = vmatprep.subr.mxu0 0.0
        %2295 = vmatpush1.msra.mxu0 0.0
        %2296 = vmatprep.subr.mxu0 0.0
        %2297 = vmatpush1.msra.mxu0 0.0
        %2298 = vmatprep.subr.mxu0 0.0
        %2299 = vmatpush1.msra.mxu0 0.0
        %2300 = vmatprep.subr.mxu0 0.0
        %2301 = vmatpush1.msra.mxu0 0.0
        %2302 = vmatprep.subr.mxu0 0.0
        %2303 = vmatpush1.msra.mxu0 0.0
        %2304 = vmatprep.subr.mxu0 0.0
        %2305 = vmatpush1.msra.mxu0 0.0
        %2306 = vmatprep.subr.mxu0 0.0
        %2307 = vmatpush1.msra.mxu0 0.0
        %2308 = vmatprep.subr.mxu0 0.0
        %2309 = vmatpush1.msra.mxu0 0.0
        %2310 = vmatprep.subr.mxu0 0.0
        %2311 = vmatpush1.msra.mxu0 0.0
        %2312 = vmatprep.subr.mxu0 0.0
        %2313 = vmatpush1.msra.mxu0 0.0
        %2314 = vmatprep.subr.mxu0 0.0
        %2315 = vmatpush1.msra.mxu0 0.0
        %2316 = vmatprep.subr.mxu0 0.0
        %2317 = vmatpush1.msra.mxu0 0.0
        %2318 = vmatprep.subr.mxu0 0.0
        %2319 = vmatpush1.msra.mxu0 0.0
        %2320 = vmatprep.subr.mxu0 0.0
        %2321 = vmatpush1.msra.mxu0 0.0
        %2322 = vmatprep.subr.mxu0 0.0
        %2323 = vmatpush1.msra.mxu0 0.0
        %2324 = vmatprep.subr.mxu0 0.0
        %2325 = vmatpush1.msra.mxu0 0.0
        %2326 = vmatprep.subr.mxu0 0.0
        %2327 = vmatpush1.msra.mxu0 0.0
        %2328 = vmatprep.subr.mxu0 0.0
        %2329 = vmatpush1.msra.mxu0 0.0
        %2330 = vmatprep.subr.mxu0 0.0
        %2331 = vmatpush1.msra.mxu0 0.0
        %2332 = vmatprep.subr.mxu0 0.0
        %2333 = vmatpush1.msra.mxu0 0.0
        %2334 = vmatprep.subr.mxu0 0.0
        %2335 = vmatpush1.msra.mxu0 0.0
        %2336 = vmatprep.subr.mxu0 0.0
        %2337 = vmatpush1.msra.mxu0 0.0
        %2338 = vmatprep.subr.mxu0 0.0
        %2339 = vmatpush1.msra.mxu0 0.0
        %2340 = vmatprep.mubr.f32.mxu0 0.0
        %2341 = vmatmul.mubr.f32.gmra.mrb[0].mxu0 %v2181
        %v2342 = vpop.f32.mrb[0].mxu0
        %v2343 = vadd.f32 0.0, %v2342
        %v2344 = vpop.f32.mrb[0].mxu0
        %2345 = vmatprep.mubr.f32.mxu0 0.0
        %2346 = vmatmul.mubr.f32.gmra.mrb[0].mxu0 %v2184
        %v2347 = vpop.f32.mrb[0].mxu0
        %v2348 = vadd.f32 0.0, %v2347
        %v2349 = vpop.f32.mrb[0].mxu0
        %2350 = vmatprep.mubr.f32.mxu0 0.0
        %2351 = vmatmul.mubr.f32.gmra.mrb[0].mxu0 %v2187
        %v2352 = vpop.f32.mrb[0].mxu0
        %v2353 = vadd.f32 0.0, %v2352
        %v2354 = vpop.f32.mrb[0].mxu0
        %2355 = vmatprep.mubr.f32.mxu0 0.0
        %2356 = vmatmul.mubr.f32.gmra.mrb[0].mxu0 %v2190
        %v2357 = vpop.f32.mrb[0].mxu0
        %v2358 = vadd.f32 0.0, %v2357
        %v2359 = vpop.f32.mrb[0].mxu0
        %2360 = vmatprep.mubr.f32.mxu0 0.0
        %2361 = vmatmul.mubr.f32.gmra.mrb[0].mxu0 %v2193
        %v2362 = vpop.f32.mrb[0].mxu0
        %v2363 = vadd.f32 0.0, %v2362
        %v2364 = vpop.f32.mrb[0].mxu0
        %2365 = vmatprep.mubr.f32.mxu0 0.0
        %2366 = vmatmul.mubr.f32.gmra.mrb[0].mxu0 %v2196
        %v2367 = vpop.f32.mrb[0].mxu0
        %v2368 = vadd.f32 0.0, %v2367
        %v2369 = vpop.f32.mrb[0].mxu0
        %2370 = vmatprep.mubr.f32.mxu0 0.0
        %2371 = vmatmul.mubr.f32.gmra.mrb[0].mxu0 %v2199
        %v2372 = vpop.f32.mrb[0].mxu0
        %v2373 = vadd.f32 0.0, %v2372
        %v2374 = vpop.f32.mrb[0].mxu0
        %2375 = vmatprep.mubr.f32.mxu0 0.0
        %2376 = vmatmul.mubr.f32.gmra.mrb[0].mxu0 %v2202
        %v2377 = vpop.f32.mrb[0].mxu0
        %v2378 = vadd.f32 0.0, %v2377
        %v2379 = vpop.f32.mrb[0].mxu0
        %2380 = vmatprep.mubr.f32.mxu0 0.0
        %2381 = vmatmul.mubr.f32.gmra.mrb[0].mxu0 %v2205
        %v2382 = vpop.f32.mrb[0].mxu0
        %v2383 = vadd.f32 0.0, %v2382
        %v2384 = vpop.f32.mrb[0].mxu0
        %2385 = vmatprep.mubr.f32.mxu0 0.0
        %2386 = vmatmul.mubr.f32.gmra.mrb[0].mxu0 %v2208
        %v2387 = vpop.f32.mrb[0].mxu0
        %v2388 = vadd.f32 0.0, %v2387
        %v2389 = vpop.f32.mrb[0].mxu0
        %2390 = vmatprep.mubr.f32.mxu0 0.0
        %2391 = vmatmul.mubr.f32.gmra.mrb[0].mxu0 %v2211
        %v2392 = vpop.f32.mrb[0].mxu0
        %v2393 = vadd.f32 0.0, %v2392
        %v2394 = vpop.f32.mrb[0].mxu0
        %2395 = vmatprep.mubr.f32.mxu0 0.0
        %2396 = vmatmul.mubr.f32.gmra.mrb[0].mxu0 %v2214
        %v2397 = vpop.f32.mrb[0].mxu0
        %v2398 = vadd.f32 0.0, %v2397
        %v2399 = vpop.f32.mrb[0].mxu0
        %2400 = vmatprep.mubr.f32.mxu0 0.0
        %2401 = vmatmul.mubr.f32.gmra.mrb[0].mxu0 %v2217
        %v2402 = vpop.f32.mrb[0].mxu0
        %v2403 = vadd.f32 0.0, %v2402
        %v2404 = vpop.f32.mrb[0].mxu0
        %2405 = vmatprep.mubr.f32.mxu0 0.0
        %2406 = vmatmul.mubr.f32.gmra.mrb[0].mxu0 %v2220
        %v2407 = vpop.f32.mrb[0].mxu0
        %v2408 = vadd.f32 0.0, %v2407
        %v2409 = vpop.f32.mrb[0].mxu0
        %2410 = vmatprep.mubr.f32.mxu0 0.0
        %2411 = vmatmul.mubr.f32.gmra.mrb[0].mxu0 %v2223
        %v2412 = vpop.f32.mrb[0].mxu0
        %v2413 = vadd.f32 0.0, %v2412
        %v2414 = vpop.f32.mrb[0].mxu0
        %2415 = vmatprep.mubr.f32.mxu0 0.0
        %2416 = vmatmul.mubr.f32.gmra.mrb[0].mxu0 %v2226
        %v2417 = vpop.f32.mrb[0].mxu0
        %v2418 = vadd.f32 0.0, %v2417
        %v2419 = vpop.f32.mrb[0].mxu0
        %2420 = vmatprep.mubr.f32.mxu0 0.0
        %2421 = vmatmul.mubr.f32.gmra.mrb[0].mxu0 %v2229
        %v2422 = vpop.f32.mrb[0].mxu0
        %v2423 = vadd.f32 0.0, %v2422
        %v2424 = vpop.f32.mrb[0].mxu0
        %2425 = vmatprep.mubr.f32.mxu0 0.0
        %2426 = vmatmul.mubr.f32.gmra.mrb[0].mxu0 %v2232
        %v2427 = vpop.f32.mrb[0].mxu0
        %v2428 = vadd.f32 0.0, %v2427
        %v2429 = vpop.f32.mrb[0].mxu0
        %2430 = vmatprep.mubr.f32.mxu0 0.0
        %2431 = vmatmul.mubr.f32.gmra.mrb[0].mxu0 %v2235
        %v2432 = vpop.f32.mrb[0].mxu0
        %v2433 = vadd.f32 0.0, %v2432
        %v2434 = vpop.f32.mrb[0].mxu0
        %2435 = vmatprep.mubr.f32.mxu0 0.0
        %2436 = vmatmul.mubr.f32.gmra.mrb[0].mxu0 %v2238
        %v2437 = vpop.f32.mrb[0].mxu0
        %v2438 = vadd.f32 0.0, %v2437
        %v2439 = vpop.f32.mrb[0].mxu0
        %2440 = vmatprep.mubr.f32.mxu0 0.0
        %2441 = vmatmul.mubr.f32.gmra.mrb[0].mxu0 %v2241
        %v2442 = vpop.f32.mrb[0].mxu0
        %v2443 = vadd.f32 0.0, %v2442
        %v2444 = vpop.f32.mrb[0].mxu0
        %2445 = vmatprep.mubr.f32.mxu0 0.0
        %2446 = vmatmul.mubr.f32.gmra.mrb[0].mxu0 %v2244
        %v2447 = vpop.f32.mrb[0].mxu0
        %v2448 = vadd.f32 0.0, %v2447
        %v2449 = vpop.f32.mrb[0].mxu0
        %2450 = vmatprep.mubr.f32.mxu0 0.0
        %2451 = vmatmul.mubr.f32.gmra.mrb[0].mxu0 %v2247
        %v2452 = vpop.f32.mrb[0].mxu0
        %v2453 = vadd.f32 0.0, %v2452
        %v2454 = vpop.f32.mrb[0].mxu0
        %2455 = vmatprep.mubr.f32.mxu0 0.0
        %2456 = vmatmul.mubr.f32.gmra.mrb[0].mxu0 %v2250
        %v2457 = vpop.f32.mrb[0].mxu0
        %v2458 = vadd.f32 0.0, %v2457
        %v2459 = vpop.f32.mrb[0].mxu0
        %2460 = vmatprep.mubr.f32.mxu0 0.0
        %2461 = vmatmul.mubr.f32.gmra.mrb[0].mxu0 %v2253
        %v2462 = vpop.f32.mrb[0].mxu0
        %v2463 = vadd.f32 0.0, %v2462
        %v2464 = vpop.f32.mrb[0].mxu0
        %2465 = vmatprep.mubr.f32.mxu0 0.0
        %2466 = vmatmul.mubr.f32.gmra.mrb[0].mxu0 %v2256
        %v2467 = vpop.f32.mrb[0].mxu0
        %v2468 = vadd.f32 0.0, %v2467
        %v2469 = vpop.f32.mrb[0].mxu0
        %2470 = vmatprep.mubr.f32.mxu0 0.0
        %2471 = vmatmul.mubr.f32.gmra.mrb[0].mxu0 %v2259
        %v2472 = vpop.f32.mrb[0].mxu0
        %v2473 = vadd.f32 0.0, %v2472
        %v2474 = vpop.f32.mrb[0].mxu0
        %2475 = vmatprep.mubr.f32.mxu0 0.0
        %2476 = vmatmul.mubr.f32.gmra.mrb[0].mxu0 %v2262
        %v2477 = vpop.f32.mrb[0].mxu0
        %v2478 = vadd.f32 0.0, %v2477
        %v2479 = vpop.f32.mrb[0].mxu0
        %2480 = vmatprep.mubr.f32.mxu0 0.0
        %2481 = vmatmul.mubr.f32.gmra.mrb[0].mxu0 %v2265
        %v2482 = vpop.f32.mrb[0].mxu0
        %v2483 = vadd.f32 0.0, %v2482
        %v2484 = vpop.f32.mrb[0].mxu0
        %2485 = vmatprep.mubr.f32.mxu0 0.0
        %2486 = vmatmul.mubr.f32.gmra.mrb[0].mxu0 %v2268
        %v2487 = vpop.f32.mrb[0].mxu0
        %v2488 = vadd.f32 0.0, %v2487
        %v2489 = vpop.f32.mrb[0].mxu0
        %2490 = vmatprep.mubr.f32.mxu0 0.0
        %2491 = vmatmul.mubr.f32.gmra.mrb[0].mxu0 %v2271
        %v2492 = vpop.f32.mrb[0].mxu0
        %v2493 = vadd.f32 0.0, %v2492
        %v2494 = vpop.f32.mrb[0].mxu0
        %2495 = vmatprep.mubr.f32.mxu0 0.0
        %2496 = vmatmul.mubr.f32.gmra.mrb[0].mxu0 %v2274
        %v2497 = vpop.f32.mrb[0].mxu0
        %v2498 = vadd.f32 0.0, %v2497
        %v2499 = vpop.f32.mrb[0].mxu0
        %2500 = vdwg.mxu0
        %v2501 = vmul.f32 %v2343, %v1111
        %v2502 = vmul.f32 %v2348, %v1111
        %v2503 = vmul.f32 %v2353, %v1111
        %v2504 = vmul.f32 %v2358, %v1111
        %v2505 = vmul.f32 %v2363, %v1111
        %v2506 = vmul.f32 %v2368, %v1111
        %v2507 = vmul.f32 %v2373, %v1111
        %v2508 = vmul.f32 %v2378, %v1111
        %v2509 = vmul.f32 %v2383, %v1111
        %v2510 = vmul.f32 %v2388, %v1111
        %v2511 = vmul.f32 %v2393, %v1111
        %v2512 = vmul.f32 %v2398, %v1111
        %v2513 = vmul.f32 %v2403, %v1111
        %v2514 = vmul.f32 %v2408, %v1111
        %v2515 = vmul.f32 %v2413, %v1111
        %v2516 = vmul.f32 %v2418, %v1111
        %v2517 = vmul.f32 %v2423, %v1111
        %v2518 = vmul.f32 %v2428, %v1111
        %v2519 = vmul.f32 %v2433, %v1111
        %v2520 = vmul.f32 %v2438, %v1111
        %v2521 = vmul.f32 %v2443, %v1111
        %v2522 = vmul.f32 %v2448, %v1111
        %v2523 = vmul.f32 %v2453, %v1111
        %v2524 = vmul.f32 %v2458, %v1111
        %v2525 = vmul.f32 %v2463, %v1111
        %v2526 = vmul.f32 %v2468, %v1111
        %v2527 = vmul.f32 %v2473, %v1111
        %v2528 = vmul.f32 %v2478, %v1111
        %v2529 = vmul.f32 %v2483, %v1111
        %v2530 = vmul.f32 %v2488, %v1111
        %v2531 = vmul.f32 %v2493, %v1111
        %v2532 = vmul.f32 %v2498, %v1111
        %v2533 = vadd.f32 %v2501, %v1149
        %v2534 = vadd.f32 %v2502, %v1149
        %v2535 = vadd.f32 %v2503, %v1149
        %v2536 = vadd.f32 %v2504, %v1149
        %v2537 = vadd.f32 %v2505, %v1149
        %v2538 = vadd.f32 %v2506, %v1149
        %v2539 = vadd.f32 %v2507, %v1149
        %v2540 = vadd.f32 %v2508, %v1149
        %v2541 = vadd.f32 %v2509, %v1149
        %v2542 = vadd.f32 %v2510, %v1149
        %v2543 = vadd.f32 %v2511, %v1149
        %v2544 = vadd.f32 %v2512, %v1149
        %v2545 = vadd.f32 %v2513, %v1149
        %v2546 = vadd.f32 %v2514, %v1149
        %v2547 = vadd.f32 %v2515, %v1149
        %v2548 = vadd.f32 %v2516, %v1149
        %v2549 = vadd.f32 %v2517, %v1149
        %v2550 = vadd.f32 %v2518, %v1149
        %v2551 = vadd.f32 %v2519, %v1149
        %v2552 = vadd.f32 %v2520, %v1149
        %v2553 = vadd.f32 %v2521, %v1149
        %v2554 = vadd.f32 %v2522, %v1149
        %v2555 = vadd.f32 %v2523, %v1149
        %v2556 = vadd.f32 %v2524, %v1149
        %v2557 = vadd.f32 %v2525, %v1149
        %v2558 = vadd.f32 %v2526, %v1149
        %v2559 = vadd.f32 %v2527, %v1149
        %v2560 = vadd.f32 %v2528, %v1149
        %v2561 = vadd.f32 %v2529, %v1149
        %v2562 = vadd.f32 %v2530, %v1149
        %v2563 = vadd.f32 %v2531, %v1149
        %v2564 = vadd.f32 %v2532, %v1149
        %v2565 = vmax.f32 %v2533, 0.0
        %v2566 = vmax.f32 %v2534, 0.0
        %v2567 = vmax.f32 %v2535, 0.0
        %v2568 = vmax.f32 %v2536, 0.0
        %v2569 = vmax.f32 %v2537, 0.0
        %v2570 = vmax.f32 %v2538, 0.0
        %v2571 = vmax.f32 %v2539, 0.0
        %v2572 = vmax.f32 %v2540, 0.0
        %v2573 = vmax.f32 %v2541, 0.0
        %v2574 = vmax.f32 %v2542, 0.0
        %v2575 = vmax.f32 %v2543, 0.0
        %v2576 = vmax.f32 %v2544, 0.0
        %v2577 = vmax.f32 %v2545, 0.0
        %v2578 = vmax.f32 %v2546, 0.0
        %v2579 = vmax.f32 %v2547, 0.0
        %v2580 = vmax.f32 %v2548, 0.0
        %v2581 = vmax.f32 %v2549, 0.0
        %v2582 = vmax.f32 %v2550, 0.0
        %v2583 = vmax.f32 %v2551, 0.0
        %v2584 = vmax.f32 %v2552, 0.0
        %v2585 = vmax.f32 %v2553, 0.0
        %v2586 = vmax.f32 %v2554, 0.0
        %v2587 = vmax.f32 %v2555, 0.0
        %v2588 = vmax.f32 %v2556, 0.0
        %v2589 = vmax.f32 %v2557, 0.0
        %v2590 = vmax.f32 %v2558, 0.0
        %v2591 = vmax.f32 %v2559, 0.0
        %v2592 = vmax.f32 %v2560, 0.0
        %v2593 = vmax.f32 %v2561, 0.0
        %v2594 = vmax.f32 %v2562, 0.0
        %v2595 = vmax.f32 %v2563, 0.0
        %v2596 = vmax.f32 %v2564, 0.0
        %v2597 = vmax.f32 %v2115, %v2565
        %v2598 = vmax.f32 %v2116, %v2566
        %v2599 = vmax.f32 %v2117, %v2567
        %v2600 = vmax.f32 %v2118, %v2568
        %v2601 = vmax.f32 %v2119, %v2569
        %v2602 = vmax.f32 %v2120, %v2570
        %v2603 = vmax.f32 %v2121, %v2571
        %v2604 = vmax.f32 %v2122, %v2572
        %v2605 = vmax.f32 %v2123, %v2573
        %v2606 = vmax.f32 %v2124, %v2574
        %v2607 = vmax.f32 %v2125, %v2575
        %v2608 = vmax.f32 %v2126, %v2576
        %v2609 = vmax.f32 %v2127, %v2577
        %v2610 = vmax.f32 %v2128, %v2578
        %v2611 = vmax.f32 %v2129, %v2579
        %v2612 = vmax.f32 %v2130, %v2580
        %v2613 = vmax.f32 %v2131, %v2581
        %v2614 = vmax.f32 %v2132, %v2582
        %v2615 = vmax.f32 %v2133, %v2583
        %v2616 = vmax.f32 %v2134, %v2584
        %v2617 = vmax.f32 %v2135, %v2585
        %v2618 = vmax.f32 %v2136, %v2586
        %v2619 = vmax.f32 %v2137, %v2587
        %v2620 = vmax.f32 %v2138, %v2588
        %v2621 = vmax.f32 %v2139, %v2589
        %v2622 = vmax.f32 %v2140, %v2590
        %v2623 = vmax.f32 %v2141, %v2591
        %v2624 = vmax.f32 %v2142, %v2592
        %v2625 = vmax.f32 %v2143, %v2593
        %v2626 = vmax.f32 %v2144, %v2594
        %v2627 = vmax.f32 %v2145, %v2595
        %v2628 = vmax.f32 %v2146, %v2596
        %v2629 = vmax.f32 %v1665, %v2597
        %v2630 = vmax.f32 %v1666, %v2598
        %v2631 = vmax.f32 %v1667, %v2599
        %v2632 = vmax.f32 %v1668, %v2600
        %v2633 = vmax.f32 %v1669, %v2601
        %v2634 = vmax.f32 %v1670, %v2602
        %v2635 = vmax.f32 %v1671, %v2603
        %v2636 = vmax.f32 %v1672, %v2604
        %v2637 = vmax.f32 %v1673, %v2605
        %v2638 = vmax.f32 %v1674, %v2606
        %v2639 = vmax.f32 %v1675, %v2607
        %v2640 = vmax.f32 %v1676, %v2608
        %v2641 = vmax.f32 %v1677, %v2609
        %v2642 = vmax.f32 %v1678, %v2610
        %v2643 = vmax.f32 %v1679, %v2611
        %v2644 = vmax.f32 %v1680, %v2612
        %v2645 = vmax.f32 %v1681, %v2613
        %v2646 = vmax.f32 %v1682, %v2614
        %v2647 = vmax.f32 %v1683, %v2615
        %v2648 = vmax.f32 %v1684, %v2616
        %v2649 = vmax.f32 %v1685, %v2617
        %v2650 = vmax.f32 %v1686, %v2618
        %v2651 = vmax.f32 %v1687, %v2619
        %v2652 = vmax.f32 %v1688, %v2620
        %v2653 = vmax.f32 %v1689, %v2621
        %v2654 = vmax.f32 %v1690, %v2622
        %v2655 = vmax.f32 %v1691, %v2623
        %v2656 = vmax.f32 %v1692, %v2624
        %v2657 = vmax.f32 %v1693, %v2625
        %v2658 = vmax.f32 %v1694, %v2626
        %v2659 = vmax.f32 %v1695, %v2627
        %v2660 = vmax.f32 %v1696, %v2628
        %vm2661 = vcmask 261120
        %2662 = vst.msk [vmem:[%s741] sm:$0xff] %vm2661, %v2629
        %2663 = vst.msk [vmem:[%s741 + $0x8] sm:$0xff] %vm2661, %v2630
        %2664 = vst.msk [vmem:[%s741 + $0x10] sm:$0xff] %vm2661, %v2631
        %2665 = vst.msk [vmem:[%s741 + $0x18] sm:$0xff] %vm2661, %v2632
        %2666 = vst.msk [vmem:[%s741 + $0x20] sm:$0xff] %vm2661, %v2633
        %2667 = vst.msk [vmem:[%s741 + $0x28] sm:$0xff] %vm2661, %v2634
        %2668 = vst.msk [vmem:[%s741 + $0x30] sm:$0xff] %vm2661, %v2635
        %2669 = vst.msk [vmem:[%s741 + $0x38] sm:$0xff] %vm2661, %v2636
        %2670 = vst.msk [vmem:[%s741 + $0x40] sm:$0xff] %vm2661, %v2637
        %2671 = vst.msk [vmem:[%s741 + $0x48] sm:$0xff] %vm2661, %v2638
        %2672 = vst.msk [vmem:[%s741 + $0x50] sm:$0xff] %vm2661, %v2639
        %2673 = vst.msk [vmem:[%s741 + $0x58] sm:$0xff] %vm2661, %v2640
        %2674 = vst.msk [vmem:[%s741 + $0x60] sm:$0xff] %vm2661, %v2641
        %2675 = vst.msk [vmem:[%s741 + $0x68] sm:$0xff] %vm2661, %v2642
        %2676 = vst.msk [vmem:[%s741 + $0x70] sm:$0xff] %vm2661, %v2643
        %2677 = vst.msk [vmem:[%s741 + $0x78] sm:$0xff] %vm2661, %v2644
        %2678 = vst.msk [vmem:[%s741 + $0x80] sm:$0xff] %vm2661, %v2645
        %2679 = vst.msk [vmem:[%s741 + $0x88] sm:$0xff] %vm2661, %v2646
        %2680 = vst.msk [vmem:[%s741 + $0x90] sm:$0xff] %vm2661, %v2647
        %2681 = vst.msk [vmem:[%s741 + $0x98] sm:$0xff] %vm2661, %v2648
        %2682 = vst.msk [vmem:[%s741 + $0xa0] sm:$0xff] %vm2661, %v2649
        %2683 = vst.msk [vmem:[%s741 + $0xa8] sm:$0xff] %vm2661, %v2650
        %2684 = vst.msk [vmem:[%s741 + $0xb0] sm:$0xff] %vm2661, %v2651
        %2685 = vst.msk [vmem:[%s741 + $0xb8] sm:$0xff] %vm2661, %v2652
        %2686 = vst.msk [vmem:[%s741 + $0xc0] sm:$0xff] %vm2661, %v2653
        %2687 = vst.msk [vmem:[%s741 + $0xc8] sm:$0xff] %vm2661, %v2654
        %2688 = vst.msk [vmem:[%s741 + $0xd0] sm:$0xff] %vm2661, %v2655
        %2689 = vst.msk [vmem:[%s741 + $0xd8] sm:$0xff] %vm2661, %v2656
        %2690 = vst.msk [vmem:[%s741 + $0xe0] sm:$0xff] %vm2661, %v2657
        %2691 = vst.msk [vmem:[%s741 + $0xe8] sm:$0xff] %vm2661, %v2658
        %2692 = vst.msk [vmem:[%s741 + $0xf0] sm:$0xff] %vm2661, %v2659
        %2693 = vst.msk [vmem:[%s741 + $0xf8] sm:$0xff] %vm2661, %v2660
        %s2694 = smul.u32 32, %s15
        %p2695 = scmp.lt.s32.totalorder %s2694, 63
        %s2696 = scalar_select %p2695, %s2694, 63
        %s2697 = smul.addr %s2696, 8
        %s2698 = scalar_lea.vmem %s4, %s2697
        // Predicated region
        $region75: #{tpu_custom_call.1} parent=69 // pred_check
          %p2699 = pneg %p122
        $region76: #{tpu_custom_call.1} parent=69 // pred_check_branch
          %2701 = sbr.rel (%p2699) target = $region78
        $region77: #{tpu_custom_call.1} parent=69 // pred_region
          %s2702 = smul.u32 32, %s15
        $region78: #{tpu_custom_call.1} parent=69 // pred_fallthru
          _
      $region70: #{tpu_custom_call.1} parent=5 // pred_fallthru
        _
      %p2703 = scmp.le.s32.totalorder 2, %s10
      // Predicated region
      $region79: #{tpu_custom_call.1} parent=5 // pred_check
        %p2704 = pneg %p2703
      $region80: #{tpu_custom_call.1} parent=5 // pred_check_branch
        %2706 = sbr.rel (%p2704) target = $region82
      $region81: #{tpu_custom_call.1} parent=5 // pred_region
        %s2707 = ssub.s32 %s10, 2
        // Predicated region
        $region83: #{tpu_custom_call.1} parent=81 // pred_check
          %p2708 = pneg %p128
        $region84: #{tpu_custom_call.1} parent=81 // pred_check_branch
          %2710 = sbr.rel (%p2708) target = $region86
        $region85: #{tpu_custom_call.1} parent=81 // pred_region
          %s2711 = smul.u32 32, %s16
          %p2712 = scmp.lt.s32.totalorder %s2711, 63
          %s2713 = scalar_select %p2712, %s2711, 63
          %s2714 = smul.addr %s2713, 8
          %s2715 = scalar_lea.vmem %s4, %s2714
        $region86: #{tpu_custom_call.1} parent=81 // pred_fallthru
          _
      $region82: #{tpu_custom_call.1} parent=5 // pred_fallthru
        _
    $region6: #{tpu_custom_call.1} parent=1 // loop_footer
      %s14 = sadd.s32 1, %s10
    $region7: #{tpu_custom_call.1} parent=1 // loop_footer_branch
      %9 = sbr.rel target = $region3
    $region8: #{tpu_custom_call.1} parent=1 // loop_exit
      _

</llo_original>
